<compile_context>
chip_gen: v6e
topology: v6e:2x2x1
jax: 0.10.0
libtpu: 0.0.40
codegen_flags: <defaults>
</compile_context>

<pallas_src>
import jax
import jax.numpy as jnp
import numpy as np
from jax.experimental import pallas as pl
from jax.experimental.pallas import tpu as pltpu


# ----------------------------------------------------------------------------
# Fused decoder kernel (one grid step == B batch elements, batch on lanes)
# ----------------------------------------------------------------------------
def _decoder_kernel(x_ref, m_ref, wt_ref, bt_ref, w4_ref, b4_ref, w5_ref,
                    b5_ref, o_ref, c2_ref, c3_ref):
    f32 = jnp.float32
    w0 = o_ref.shape[1]            # B * 64   (useful lane width)
    w2 = c2_ref.shape[1]           # w0 + 32
    w3 = c3_ref.shape[1]           # w0 + 16

    def k2s1(src_ref, layer, width, mask):
        """ConvTranspose2d(k=2, s=1) + ReLU over flat 8-wide per-sample canvases.

        Z[:, c] = sum_t W_t @ src[:, c + off_t] with off = {0, 1, 8, 9}; the
        constant lane mask zeroes every non-valid canvas position (including
        cross-sample junk reads), so the result is again a correctly
        zero-bordered canvas for the next layer."""
        acc = jnp.dot(wt_ref[4 * layer], src_ref[:, 0:width],
                      preferred_element_type=f32)
        for t, off in ((1, 1), (2, 8), (3, 9)):
            acc = acc + jnp.dot(wt_ref[4 * layer + t],
                                src_ref[:, off: off + width],
                                preferred_element_type=f32)
        return jnp.maximum(acc + bt_ref[layer], 0.0) * mask

    # ---- three k=2, s=1 transposed convs + ReLU -----------------------------
    c2_ref[...] = k2s1(x_ref, 0, w2, m_ref[0:1, 0:w2])    # 5x5 valid @ rows/cols 2..6
    c3_ref[...] = k2s1(c2_ref, 1, w3, m_ref[1:2, 0:w3])   # 6x6 valid @ rows/cols 1..6
    a3 = k2s1(c3_ref, 2, w0, m_ref[2:3, 0:w0])            # 7x7 valid @ rows/cols 0..6

    # ---- layer 4: k=2, s=2, 12 -> 6, ReLU (4 taps stacked on sublanes) ------
    a4 = jnp.maximum(jnp.dot(w4_ref[...], a3, preferred_element_type=f32)
                     + b4_ref[...], 0.0)                  # (24, B*64)

    # ---- layer 5: k=2, s=2, 6 -> 1 + exact sigmoid (block-diagonal matmul) --
    # row index 8a + 4b + 2c + d holds output pixel (4h+2a+c, 4w+2b+d) at
    # column sample*64 + 8h + w; de-interleaved to NCHW by the wrapper.
    z5 = jnp.dot(w5_ref[...], a4, preferred_element_type=f32) + b5_ref[...]
    o_ref[...] = 1.0 / (1.0 + jnp.exp(-z5))               # (16, B*64), lane dense


# ----------------------------------------------------------------------------
# Parameters: raw PyTorch-layout init + one-time packing into kernel layout
# ----------------------------------------------------------------------------
def init_decoder_params(key):
    """Deterministic PyTorch-style uniform init; weights are (Cin, Cout, kH, kW)."""
    def deconv_param(k, cin, cout, ksz):
        kw, kb = jax.random.split(k)
        bound = 1.0 / float(np.sqrt(cin * ksz * ksz))
        w = jax.random.uniform(kw, (cin, cout, ksz, ksz), jnp.float32, -bound, bound)
        b = jax.random.uniform(kb, (cout,), jnp.float32, -bound, bound)
        return w, b

    keys = jax.random.split(key, 5)
    return {
        "up_convT1": deconv_param(keys[0], 12, 12, 2),
        "up_convT2": deconv_param(keys[1], 12, 12, 2),
        "up_convT3": deconv_param(keys[2], 12, 12, 2),
        "up_convT4": deconv_param(keys[3], 12, 6, 2),
        "up_convT5": deconv_param(keys[4], 6, 1, 2),
    }


def pack_decoder_params(raw):
    """One-time repack of PyTorch-layout weights into the fused-kernel layout."""
    def taps_s1(w):      # flipped kernel, tap t = 2a+b -> (Cout, Cin)
        return jnp.stack([jnp.transpose(w[:, :, 1 - a, 1 - b])
                          for a in range(2) for b in range(2)], 0)

    def taps_s2(w):      # un-flipped (stride-2 scatter), tap t = 2a+b
        return jnp.stack([jnp.transpose(w[:, :, a, b])
                          for a in range(2) for b in range(2)], 0)

    w1, b1 = raw["up_convT1"]
    w2, b2 = raw["up_convT2"]
    w3, b3 = raw["up_convT3"]
    wt123 = jnp.concatenate([taps_s1(w1), taps_s1(w2), taps_s1(w3)], 0)  # (12,12,12)
    bt123 = jnp.stack([b1, b2, b3], 0).reshape(3, 12, 1)

    w4, b4 = raw["up_convT4"]
    w4s = taps_s2(w4).reshape(24, 12)                      # row = 6*(2a+b) + cout
    b4s = jnp.tile(b4.reshape(1, 6), (4, 1)).reshape(24, 1)

    w5, b5 = raw["up_convT5"]                              # (6,1,2,2), (1,)
    w5_np = np.asarray(w5, np.float32)
    blk = np.zeros((4, 6), np.float32)                     # row = 2c+d, col = channel
    for c in range(2):
        for d in range(2):
            blk[2 * c + d] = w5_np[:, 0, c, d]
    w5bd = np.zeros((16, 24), np.float32)                  # 4x block-diagonal copies
    for t in range(4):
        w5bd[4 * t: 4 * t + 4, 6 * t: 6 * t + 6] = blk
    b5r = jnp.full((16, 1), float(np.asarray(b5)[0]), jnp.float32)

    return {"wt123": wt123, "bt123": bt123, "w4": w4s, "b4": b4s,
            "w5": jnp.asarray(w5bd), "b5": b5r}


# ----------------------------------------------------------------------------
# Host-side helpers (all static-shape; constant-folded under jit)
# ----------------------------------------------------------------------------
def _pick_block_batch(n):
    """Batch samples onto the lane axis; keep grid >= 2 when N >= 2 (v7x megacore)."""
    if n <= 1:
        return 1
    return max(1, min(64, n // 2))


def _build_masks(blk_b, w0, w2):
    """Per-layer valid-region lane masks over the flat 8x8 per-sample canvases."""
    p = np.arange(64)
    row, col = p // 8, p % 8

    def sample_mask(lo):
        return ((row >= lo) & (row <= 6) &
                (col >= lo) & (col <= 6)).astype(np.float32)

    m = np.zeros((3, w2), np.float32)
    for layer, lo in enumerate((2, 1, 0)):     # valid region grows toward (0,0)
        m[layer, :w0] = np.tile(sample_mask(lo), blk_b)
    return m


# ----------------------------------------------------------------------------
# Forward pass: one fused pallas_call over a parallel batch-block grid
# ----------------------------------------------------------------------------
@jax.jit
def decoder_forward(packed, t_nchw):
    """Matches PyTorch Decoder.forward: NCHW (N, 12, 4, 4) in -> (N, 1, 28, 28) out."""
    N, C, H, W = t_nchw.shape
    assert (C, H, W) == (12, 4, 4), "kernel is specialized to the 12x4x4 MNIST latent"

    B = _pick_block_batch(N)
    S = -(-N // B)                    # grid length
    Np = S * B
    w0 = B * 64                       # useful lane width per grid step
    w1, w2, w3 = w0 + 48, w0 + 32, w0 + 16   # canvas widths (tap-read headroom)

    x = t_nchw.astype(jnp.float32)
    if Np != N:
        x = jnp.pad(x, ((0, Np - N), (0, 0), (0, 0), (0, 0)))
    # Embed each 4x4 latent at rows/cols 3..6 of a zero 8x8 canvas, flatten, and
    # put the per-step batch on the lane axis: (S, 12, B*64) + 48 zero tail lanes.
    xc = jnp.pad(x, ((0, 0), (0, 0), (3, 1), (3, 1)))            # (Np, 12, 8, 8)
    xc = xc.reshape(S, B, 12, 64).transpose(0, 2, 1, 3).reshape(S, 12, w0)
    xc = jnp.pad(xc, ((0, 0), (0, 0), (0, w1 - w0)))

    masks = jnp.asarray(_build_masks(B, w0, w2))

    flops = 2 * S * (4 * 144 * (w2 + w3 + w0) + 24 * 12 * w0 + 16 * 24 * w0)
    bytes_accessed = 4 * (S * (12 * w1 + 16 * w0) + 3 * w2
                          + 12 * 144 + 36 + 24 * 12 + 24 + 16 * 24 + 16)

    out = pl.pallas_call(
        _decoder_kernel,
        out_shape=jax.ShapeDtypeStruct((S, 16, w0), jnp.float32),
        grid_spec=pltpu.PrefetchScalarGridSpec(
            num_scalar_prefetch=0,
            grid=(S,),
            in_specs=[
                pl.BlockSpec((None, 12, w1), lambda s: (s, 0, 0)),   # input canvases
                pl.BlockSpec((3, w2), lambda s: (0, 0)),             # lane masks
                pl.BlockSpec((12, 12, 12), lambda s: (0, 0, 0)),     # taps, layers 1-3
                pl.BlockSpec((3, 12, 1), lambda s: (0, 0, 0)),       # biases, layers 1-3
                pl.BlockSpec((24, 12), lambda s: (0, 0)),            # layer-4 taps
                pl.BlockSpec((24, 1), lambda s: (0, 0)),             # layer-4 bias
                pl.BlockSpec((16, 24), lambda s: (0, 0)),            # layer-5 block-diag
                pl.BlockSpec((16, 1), lambda s: (0, 0)),             # layer-5 bias
            ],
            out_specs=pl.BlockSpec((None, 16, w0), lambda s: (s, 0, 0)),
            scratch_shapes=[pltpu.VMEM((12, w2), jnp.float32),       # canvas 2
                            pltpu.VMEM((12, w3), jnp.float32)],      # canvas 3
        ),
        compiler_params=pltpu.CompilerParams(
            dimension_semantics=("parallel",),
            vmem_limit_bytes=32 * 1024 * 1024,
        ),
        cost_estimate=pl.CostEstimate(
            flops=flops, transcendentals=S * 16 * w0,
            bytes_accessed=bytes_accessed),
    )(xc, masks, packed["wt123"], packed["bt123"], packed["w4"], packed["b4"],
      packed["w5"], packed["b5"])

    # De-interleaved (a,b,c,d | h,w) -> NCHW (N, 1, 28, 28): pure layout plumbing.
    y = out.reshape(S, 16, B, 64).transpose(0, 2, 1, 3).reshape(Np, 16, 8, 8)
    y = y[:, :, :7, :7].reshape(Np, 2, 2, 2, 2, 7, 7)        # (n, a, b, c, d, h, w)
    y = y.transpose(0, 5, 1, 3, 6, 2, 4).reshape(Np, 1, 28, 28)
    return y[:N]


# ----------------------------------------------------------------------------
# Pure-JAX reference (lax dilated conv) for numerical validation
# ----------------------------------------------------------------------------
@jax.jit
def decoder_forward_ref(raw, t):
    def up(x, w, b, stride):
        # ConvTranspose2d == dilated-input conv with the flipped, transposed kernel.
        w_f = jnp.transpose(w, (1, 0, 2, 3))[:, :, ::-1, ::-1]
        y = jax.lax.conv_general_dilated(
            x, w_f, window_strides=(1, 1), padding=[(1, 1), (1, 1)],
            lhs_dilation=(stride, stride), rhs_dilation=(1, 1),
            dimension_numbers=("NCHW", "OIHW", "NCHW"))
        return y + b.reshape(1, -1, 1, 1)

    x = t.astype(jnp.float32)
    x = jax.nn.relu(up(x, *raw["up_convT1"], stride=1))
    x = jax.nn.relu(up(x, *raw["up_convT2"], stride=1))
    x = jax.nn.relu(up(x, *raw["up_convT3"], stride=1))
    x = jax.nn.relu(up(x, *raw["up_convT4"], stride=2))
    x = up(x, *raw["up_convT5"], stride=2)
    return jax.nn.sigmoid(x)


if __name__ == "__main__":
    key = jax.random.PRNGKey(0)
    pkey, xkey = jax.random.split(key)
    raw_params = init_decoder_params(pkey)
    packed_params = pack_decoder_params(raw_params)

    # MNIST-autoencoder latent: (N=4, C=12, H=4, W=4) -> decoder output (4, 1, 28, 28)
    # (N=4 with block_batch=2 keeps the grid at 2 steps for v7x's two TensorCores.)
    t = jax.random.normal(xkey, (4, 12, 4, 4), dtype=jnp.float32)

    out = jax.block_until_ready(decoder_forward(packed_params, t))
    ref = jax.block_until_ready(decoder_forward_ref(raw_params, t))

    assert out.shape == (4, 1, 28, 28), out.shape
    assert bool(jnp.all(jnp.isfinite(out)))
    max_err = float(jnp.max(jnp.abs(out - ref)))
    assert max_err < 2e-2, f"max |pallas - reference| = {max_err}"
    print("KERNEL_OK")
</pallas_src>

<mosaic_0001>
module attributes {stable_mosaic.version = 11 : i64} {
  func.func @_decoder_kernel(%arg0: i32, %arg1: memref<1x12x176xf32, #tpu.memory_space<vmem>>, %arg2: memref<3x160xf32, #tpu.memory_space<vmem>>, %arg3: memref<12x12x12xf32, #tpu.memory_space<vmem>>, %arg4: memref<3x12x1xf32, #tpu.memory_space<vmem>>, %arg5: memref<24x12xf32, #tpu.memory_space<vmem>>, %arg6: memref<24x1xf32, #tpu.memory_space<vmem>>, %arg7: memref<16x24xf32, #tpu.memory_space<vmem>>, %arg8: memref<16x1xf32, #tpu.memory_space<vmem>>, %arg9: memref<1x16x128xf32, #tpu.memory_space<vmem>>, %arg10: memref<12x160xf32, #tpu.memory_space<vmem>>, %arg11: memref<12x144xf32, #tpu.memory_space<vmem>>) attributes {dimension_semantics = [#tpu.dimension_semantics<parallel>], iteration_bounds = array<i64: 2>, scalar_prefetch = 0 : i64, scratch_operands = 2 : i64, tpu.core_type = #tpu.core_type<tc>, window_params = [{transform_indices = @transform_0, window_bounds = array<i64: 1, 12, 176>}, {pipeline_mode = #tpu.pipeline_mode<synchronous>, transform_indices = @transform_1, window_bounds = array<i64: 3, 160>}, {pipeline_mode = #tpu.pipeline_mode<synchronous>, transform_indices = @transform_2, window_bounds = array<i64: 12, 12, 12>}, {pipeline_mode = #tpu.pipeline_mode<synchronous>, transform_indices = @transform_3, window_bounds = array<i64: 3, 12, 1>}, {pipeline_mode = #tpu.pipeline_mode<synchronous>, transform_indices = @transform_4, window_bounds = array<i64: 24, 12>}, {pipeline_mode = #tpu.pipeline_mode<synchronous>, transform_indices = @transform_5, window_bounds = array<i64: 24, 1>}, {pipeline_mode = #tpu.pipeline_mode<synchronous>, transform_indices = @transform_6, window_bounds = array<i64: 16, 24>}, {pipeline_mode = #tpu.pipeline_mode<synchronous>, transform_indices = @transform_7, window_bounds = array<i64: 16, 1>}, {transform_indices = @transform_8, window_bounds = array<i64: 1, 16, 128>}]} {
    %c0 = arith.constant 0 : index
    %c0_0 = arith.constant 0 : index
    %0 = vector.load %arg2[%c0, %c0_0] : memref<3x160xf32, #tpu.memory_space<vmem>>, vector<1x160xf32>
    %c0_1 = arith.constant 0 : index
    %c0_2 = arith.constant 0 : index
    %c0_3 = arith.constant 0 : index
    %1 = vector.load %arg3[%c0_1, %c0_2, %c0_3] : memref<12x12x12xf32, #tpu.memory_space<vmem>>, vector<1x12x12xf32>
    %2 = vector.shape_cast %1 : vector<1x12x12xf32> to vector<12x12xf32>
    %c0_4 = arith.constant 0 : index
    %c0_5 = arith.constant 0 : index
    %c0_6 = arith.constant 0 : index
    %3 = vector.load %arg1[%c0_4, %c0_5, %c0_6] : memref<1x12x176xf32, #tpu.memory_space<vmem>>, vector<1x12x160xf32>
    %4 = vector.shape_cast %3 : vector<1x12x160xf32> to vector<12x160xf32>
    %cst = arith.constant dense<0.000000e+00> : vector<12x160xf32>
    %5 = tpu.matmul %2, %4, %cst {dimension_numbers = #tpu.dot_dimension_numbers<[1], [0], [0], [1], [0, 0, 1, 1], [], []>} : vector<12x12xf32>, vector<12x160xf32>, vector<12x160xf32> -> vector<12x160xf32>
    %c1 = arith.constant 1 : index
    %c0_7 = arith.constant 0 : index
    %c0_8 = arith.constant 0 : index
    %6 = vector.load %arg3[%c1, %c0_7, %c0_8] : memref<12x12x12xf32, #tpu.memory_space<vmem>>, vector<1x12x12xf32>
    %7 = vector.shape_cast %6 : vector<1x12x12xf32> to vector<12x12xf32>
    %c0_9 = arith.constant 0 : index
    %c0_10 = arith.constant 0 : index
    %c1_11 = arith.constant 1 : index
    %8 = vector.load %arg1[%c0_9, %c0_10, %c1_11] : memref<1x12x176xf32, #tpu.memory_space<vmem>>, vector<1x12x160xf32>
    %9 = vector.shape_cast %8 : vector<1x12x160xf32> to vector<12x160xf32>
    %cst_12 = arith.constant dense<0.000000e+00> : vector<12x160xf32>
    %10 = tpu.matmul %7, %9, %cst_12 {dimension_numbers = #tpu.dot_dimension_numbers<[1], [0], [0], [1], [0, 0, 1, 1], [], []>} : vector<12x12xf32>, vector<12x160xf32>, vector<12x160xf32> -> vector<12x160xf32>
    %11 = arith.addf %5, %10 : vector<12x160xf32>
    %c2 = arith.constant 2 : index
    %c0_13 = arith.constant 0 : index
    %c0_14 = arith.constant 0 : index
    %12 = vector.load %arg3[%c2, %c0_13, %c0_14] : memref<12x12x12xf32, #tpu.memory_space<vmem>>, vector<1x12x12xf32>
    %13 = vector.shape_cast %12 : vector<1x12x12xf32> to vector<12x12xf32>
    %c0_15 = arith.constant 0 : index
    %c0_16 = arith.constant 0 : index
    %c8 = arith.constant 8 : index
    %14 = vector.load %arg1[%c0_15, %c0_16, %c8] : memref<1x12x176xf32, #tpu.memory_space<vmem>>, vector<1x12x160xf32>
    %15 = vector.shape_cast %14 : vector<1x12x160xf32> to vector<12x160xf32>
    %cst_17 = arith.constant dense<0.000000e+00> : vector<12x160xf32>
    %16 = tpu.matmul %13, %15, %cst_17 {dimension_numbers = #tpu.dot_dimension_numbers<[1], [0], [0], [1], [0, 0, 1, 1], [], []>} : vector<12x12xf32>, vector<12x160xf32>, vector<12x160xf32> -> vector<12x160xf32>
    %17 = arith.addf %11, %16 : vector<12x160xf32>
    %c3 = arith.constant 3 : index
    %c0_18 = arith.constant 0 : index
    %c0_19 = arith.constant 0 : index
    %18 = vector.load %arg3[%c3, %c0_18, %c0_19] : memref<12x12x12xf32, #tpu.memory_space<vmem>>, vector<1x12x12xf32>
    %19 = vector.shape_cast %18 : vector<1x12x12xf32> to vector<12x12xf32>
    %c0_20 = arith.constant 0 : index
    %c0_21 = arith.constant 0 : index
    %c9 = arith.constant 9 : index
    %20 = vector.load %arg1[%c0_20, %c0_21, %c9] : memref<1x12x176xf32, #tpu.memory_space<vmem>>, vector<1x12x160xf32>
    %21 = vector.shape_cast %20 : vector<1x12x160xf32> to vector<12x160xf32>
    %cst_22 = arith.constant dense<0.000000e+00> : vector<12x160xf32>
    %22 = tpu.matmul %19, %21, %cst_22 {dimension_numbers = #tpu.dot_dimension_numbers<[1], [0], [0], [1], [0, 0, 1, 1], [], []>} : vector<12x12xf32>, vector<12x160xf32>, vector<12x160xf32> -> vector<12x160xf32>
    %23 = arith.addf %17, %22 : vector<12x160xf32>
    %c0_23 = arith.constant 0 : index
    %c0_24 = arith.constant 0 : index
    %c0_25 = arith.constant 0 : index
    %24 = vector.load %arg4[%c0_23, %c0_24, %c0_25] : memref<3x12x1xf32, #tpu.memory_space<vmem>>, vector<1x12x1xf32>
    %25 = vector.shape_cast %24 : vector<1x12x1xf32> to vector<12x1xf32>
    %26 = vector.broadcast %25 : vector<12x1xf32> to vector<12x160xf32>
    %27 = arith.addf %23, %26 : vector<12x160xf32>
    %cst_26 = arith.constant 0.000000e+00 : f32
    %28 = vector.broadcast %cst_26 : f32 to vector<12x160xf32>
    %29 = arith.maximumf %27, %28 : vector<12x160xf32>
    %30 = vector.broadcast %0 : vector<1x160xf32> to vector<12x160xf32>
    %31 = arith.mulf %29, %30 : vector<12x160xf32>
    %c0_27 = arith.constant 0 : index
    %c0_28 = arith.constant 0 : index
    %32 = vector.load %arg10[%c0_27, %c0_28] : memref<12x160xf32, #tpu.memory_space<vmem>>, vector<12x160xf32>
    tpu.vector_store %arg10[%c0_27, %c0_28], %31 {strides = array<i32>} : memref<12x160xf32, #tpu.memory_space<vmem>>, vector<12x160xf32>,
    %c1_29 = arith.constant 1 : index
    %c0_30 = arith.constant 0 : index
    %33 = vector.load %arg2[%c1_29, %c0_30] : memref<3x160xf32, #tpu.memory_space<vmem>>, vector<1x144xf32>
    %c4 = arith.constant 4 : index
    %c0_31 = arith.constant 0 : index
    %c0_32 = arith.constant 0 : index
    %34 = vector.load %arg3[%c4, %c0_31, %c0_32] : memref<12x12x12xf32, #tpu.memory_space<vmem>>, vector<1x12x12xf32>
    %35 = vector.shape_cast %34 : vector<1x12x12xf32> to vector<12x12xf32>
    %c0_33 = arith.constant 0 : index
    %c0_34 = arith.constant 0 : index
    %36 = vector.load %arg10[%c0_33, %c0_34] : memref<12x160xf32, #tpu.memory_space<vmem>>, vector<12x144xf32>
    %cst_35 = arith.constant dense<0.000000e+00> : vector<12x144xf32>
    %37 = tpu.matmul %35, %36, %cst_35 {dimension_numbers = #tpu.dot_dimension_numbers<[1], [0], [0], [1], [0, 0, 1, 1], [], []>} : vector<12x12xf32>, vector<12x144xf32>, vector<12x144xf32> -> vector<12x144xf32>
    %c5 = arith.constant 5 : index
    %c0_36 = arith.constant 0 : index
    %c0_37 = arith.constant 0 : index
    %38 = vector.load %arg3[%c5, %c0_36, %c0_37] : memref<12x12x12xf32, #tpu.memory_space<vmem>>, vector<1x12x12xf32>
    %39 = vector.shape_cast %38 : vector<1x12x12xf32> to vector<12x12xf32>
    %c0_38 = arith.constant 0 : index
    %c1_39 = arith.constant 1 : index
    %40 = vector.load %arg10[%c0_38, %c1_39] : memref<12x160xf32, #tpu.memory_space<vmem>>, vector<12x144xf32>
    %cst_40 = arith.constant dense<0.000000e+00> : vector<12x144xf32>
    %41 = tpu.matmul %39, %40, %cst_40 {dimension_numbers = #tpu.dot_dimension_numbers<[1], [0], [0], [1], [0, 0, 1, 1], [], []>} : vector<12x12xf32>, vector<12x144xf32>, vector<12x144xf32> -> vector<12x144xf32>
    %42 = arith.addf %37, %41 : vector<12x144xf32>
    %c6 = arith.constant 6 : index
    %c0_41 = arith.constant 0 : index
    %c0_42 = arith.constant 0 : index
    %43 = vector.load %arg3[%c6, %c0_41, %c0_42] : memref<12x12x12xf32, #tpu.memory_space<vmem>>, vector<1x12x12xf32>
    %44 = vector.shape_cast %43 : vector<1x12x12xf32> to vector<12x12xf32>
    %c0_43 = arith.constant 0 : index
    %c8_44 = arith.constant 8 : index
    %45 = vector.load %arg10[%c0_43, %c8_44] : memref<12x160xf32, #tpu.memory_space<vmem>>, vector<12x144xf32>
    %cst_45 = arith.constant dense<0.000000e+00> : vector<12x144xf32>
    %46 = tpu.matmul %44, %45, %cst_45 {dimension_numbers = #tpu.dot_dimension_numbers<[1], [0], [0], [1], [0, 0, 1, 1], [], []>} : vector<12x12xf32>, vector<12x144xf32>, vector<12x144xf32> -> vector<12x144xf32>
    %47 = arith.addf %42, %46 : vector<12x144xf32>
    %c7 = arith.constant 7 : index
    %c0_46 = arith.constant 0 : index
    %c0_47 = arith.constant 0 : index
    %48 = vector.load %arg3[%c7, %c0_46, %c0_47] : memref<12x12x12xf32, #tpu.memory_space<vmem>>, vector<1x12x12xf32>
    %49 = vector.shape_cast %48 : vector<1x12x12xf32> to vector<12x12xf32>
    %c0_48 = arith.constant 0 : index
    %c9_49 = arith.constant 9 : index
    %50 = vector.load %arg10[%c0_48, %c9_49] : memref<12x160xf32, #tpu.memory_space<vmem>>, vector<12x144xf32>
    %cst_50 = arith.constant dense<0.000000e+00> : vector<12x144xf32>
    %51 = tpu.matmul %49, %50, %cst_50 {dimension_numbers = #tpu.dot_dimension_numbers<[1], [0], [0], [1], [0, 0, 1, 1], [], []>} : vector<12x12xf32>, vector<12x144xf32>, vector<12x144xf32> -> vector<12x144xf32>
    %52 = arith.addf %47, %51 : vector<12x144xf32>
    %c1_51 = arith.constant 1 : index
    %c0_52 = arith.constant 0 : index
    %c0_53 = arith.constant 0 : index
    %53 = vector.load %arg4[%c1_51, %c0_52, %c0_53] : memref<3x12x1xf32, #tpu.memory_space<vmem>>, vector<1x12x1xf32>
    %54 = vector.shape_cast %53 : vector<1x12x1xf32> to vector<12x1xf32>
    %55 = vector.broadcast %54 : vector<12x1xf32> to vector<12x144xf32>
    %56 = arith.addf %52, %55 : vector<12x144xf32>
    %cst_54 = arith.constant 0.000000e+00 : f32
    %57 = vector.broadcast %cst_54 : f32 to vector<12x144xf32>
    %58 = arith.maximumf %56, %57 : vector<12x144xf32>
    %59 = vector.broadcast %33 : vector<1x144xf32> to vector<12x144xf32>
    %60 = arith.mulf %58, %59 : vector<12x144xf32>
    %c0_55 = arith.constant 0 : index
    %c0_56 = arith.constant 0 : index
    %61 = vector.load %arg11[%c0_55, %c0_56] : memref<12x144xf32, #tpu.memory_space<vmem>>, vector<12x144xf32>
    tpu.vector_store %arg11[%c0_55, %c0_56], %60 {strides = array<i32>} : memref<12x144xf32, #tpu.memory_space<vmem>>, vector<12x144xf32>,
    %c2_57 = arith.constant 2 : index
    %c0_58 = arith.constant 0 : index
    %62 = vector.load %arg2[%c2_57, %c0_58] : memref<3x160xf32, #tpu.memory_space<vmem>>, vector<1x128xf32>
    %c8_59 = arith.constant 8 : index
    %c0_60 = arith.constant 0 : index
    %c0_61 = arith.constant 0 : index
    %63 = vector.load %arg3[%c8_59, %c0_60, %c0_61] : memref<12x12x12xf32, #tpu.memory_space<vmem>>, vector<1x12x12xf32>
    %64 = vector.shape_cast %63 : vector<1x12x12xf32> to vector<12x12xf32>
    %c0_62 = arith.constant 0 : index
    %c0_63 = arith.constant 0 : index
    %65 = vector.load %arg11[%c0_62, %c0_63] : memref<12x144xf32, #tpu.memory_space<vmem>>, vector<12x128xf32>
    %cst_64 = arith.constant dense<0.000000e+00> : vector<12x128xf32>
    %66 = tpu.matmul %64, %65, %cst_64 {dimension_numbers = #tpu.dot_dimension_numbers<[1], [0], [0], [1], [0, 0, 1, 1], [], []>} : vector<12x12xf32>, vector<12x128xf32>, vector<12x128xf32> -> vector<12x128xf32>
    %c9_65 = arith.constant 9 : index
    %c0_66 = arith.constant 0 : index
    %c0_67 = arith.constant 0 : index
    %67 = vector.load %arg3[%c9_65, %c0_66, %c0_67] : memref<12x12x12xf32, #tpu.memory_space<vmem>>, vector<1x12x12xf32>
    %68 = vector.shape_cast %67 : vector<1x12x12xf32> to vector<12x12xf32>
    %c0_68 = arith.constant 0 : index
    %c1_69 = arith.constant 1 : index
    %69 = vector.load %arg11[%c0_68, %c1_69] : memref<12x144xf32, #tpu.memory_space<vmem>>, vector<12x128xf32>
    %cst_70 = arith.constant dense<0.000000e+00> : vector<12x128xf32>
    %70 = tpu.matmul %68, %69, %cst_70 {dimension_numbers = #tpu.dot_dimension_numbers<[1], [0], [0], [1], [0, 0, 1, 1], [], []>} : vector<12x12xf32>, vector<12x128xf32>, vector<12x128xf32> -> vector<12x128xf32>
    %71 = arith.addf %66, %70 : vector<12x128xf32>
    %c10 = arith.constant 10 : index
    %c0_71 = arith.constant 0 : index
    %c0_72 = arith.constant 0 : index
    %72 = vector.load %arg3[%c10, %c0_71, %c0_72] : memref<12x12x12xf32, #tpu.memory_space<vmem>>, vector<1x12x12xf32>
    %73 = vector.shape_cast %72 : vector<1x12x12xf32> to vector<12x12xf32>
    %c0_73 = arith.constant 0 : index
    %c8_74 = arith.constant 8 : index
    %74 = vector.load %arg11[%c0_73, %c8_74] : memref<12x144xf32, #tpu.memory_space<vmem>>, vector<12x128xf32>
    %cst_75 = arith.constant dense<0.000000e+00> : vector<12x128xf32>
    %75 = tpu.matmul %73, %74, %cst_75 {dimension_numbers = #tpu.dot_dimension_numbers<[1], [0], [0], [1], [0, 0, 1, 1], [], []>} : vector<12x12xf32>, vector<12x128xf32>, vector<12x128xf32> -> vector<12x128xf32>
    %76 = arith.addf %71, %75 : vector<12x128xf32>
    %c11 = arith.constant 11 : index
    %c0_76 = arith.constant 0 : index
    %c0_77 = arith.constant 0 : index
    %77 = vector.load %arg3[%c11, %c0_76, %c0_77] : memref<12x12x12xf32, #tpu.memory_space<vmem>>, vector<1x12x12xf32>
    %78 = vector.shape_cast %77 : vector<1x12x12xf32> to vector<12x12xf32>
    %c0_78 = arith.constant 0 : index
    %c9_79 = arith.constant 9 : index
    %79 = vector.load %arg11[%c0_78, %c9_79] : memref<12x144xf32, #tpu.memory_space<vmem>>, vector<12x128xf32>
    %cst_80 = arith.constant dense<0.000000e+00> : vector<12x128xf32>
    %80 = tpu.matmul %78, %79, %cst_80 {dimension_numbers = #tpu.dot_dimension_numbers<[1], [0], [0], [1], [0, 0, 1, 1], [], []>} : vector<12x12xf32>, vector<12x128xf32>, vector<12x128xf32> -> vector<12x128xf32>
    %81 = arith.addf %76, %80 : vector<12x128xf32>
    %c2_81 = arith.constant 2 : index
    %c0_82 = arith.constant 0 : index
    %c0_83 = arith.constant 0 : index
    %82 = vector.load %arg4[%c2_81, %c0_82, %c0_83] : memref<3x12x1xf32, #tpu.memory_space<vmem>>, vector<1x12x1xf32>
    %83 = vector.shape_cast %82 : vector<1x12x1xf32> to vector<12x1xf32>
    %84 = vector.broadcast %83 : vector<12x1xf32> to vector<12x128xf32>
    %85 = arith.addf %81, %84 : vector<12x128xf32>
    %cst_84 = arith.constant 0.000000e+00 : f32
    %86 = vector.broadcast %cst_84 : f32 to vector<12x128xf32>
    %87 = arith.maximumf %85, %86 : vector<12x128xf32>
    %88 = vector.broadcast %62 : vector<1x128xf32> to vector<12x128xf32>
    %89 = arith.mulf %87, %88 : vector<12x128xf32>
    %c0_85 = arith.constant 0 : index
    %c0_86 = arith.constant 0 : index
    %90 = vector.load %arg5[%c0_85, %c0_86] : memref<24x12xf32, #tpu.memory_space<vmem>>, vector<24x12xf32>
    %cst_87 = arith.constant dense<0.000000e+00> : vector<24x128xf32>
    %91 = tpu.matmul %90, %89, %cst_87 {dimension_numbers = #tpu.dot_dimension_numbers<[1], [0], [0], [1], [0, 0, 1, 1], [], []>} : vector<24x12xf32>, vector<12x128xf32>, vector<24x128xf32> -> vector<24x128xf32>
    %c0_88 = arith.constant 0 : index
    %c0_89 = arith.constant 0 : index
    %92 = vector.load %arg6[%c0_88, %c0_89] : memref<24x1xf32, #tpu.memory_space<vmem>>, vector<24x1xf32>
    %93 = vector.broadcast %92 : vector<24x1xf32> to vector<24x128xf32>
    %94 = arith.addf %91, %93 : vector<24x128xf32>
    %cst_90 = arith.constant 0.000000e+00 : f32
    %95 = vector.broadcast %cst_90 : f32 to vector<24x128xf32>
    %96 = arith.maximumf %94, %95 : vector<24x128xf32>
    %c0_91 = arith.constant 0 : index
    %c0_92 = arith.constant 0 : index
    %97 = vector.load %arg7[%c0_91, %c0_92] : memref<16x24xf32, #tpu.memory_space<vmem>>, vector<16x24xf32>
    %cst_93 = arith.constant dense<0.000000e+00> : vector<16x128xf32>
    %98 = tpu.matmul %97, %96, %cst_93 {dimension_numbers = #tpu.dot_dimension_numbers<[1], [0], [0], [1], [0, 0, 1, 1], [], []>} : vector<16x24xf32>, vector<24x128xf32>, vector<16x128xf32> -> vector<16x128xf32>
    %c0_94 = arith.constant 0 : index
    %c0_95 = arith.constant 0 : index
    %99 = vector.load %arg8[%c0_94, %c0_95] : memref<16x1xf32, #tpu.memory_space<vmem>>, vector<16x1xf32>
    %100 = vector.broadcast %99 : vector<16x1xf32> to vector<16x128xf32>
    %101 = arith.addf %98, %100 : vector<16x128xf32>
    %cst_96 = arith.constant 0.000000e+00 : f32
    %102 = vector.broadcast %cst_96 : f32 to vector<16x128xf32>
    %103 = arith.subf %102, %101 : vector<16x128xf32>
    %104 = math.exp %103 : vector<16x128xf32>
    %cst_97 = arith.constant 1.000000e+00 : f32
    %105 = vector.broadcast %cst_97 : f32 to vector<16x128xf32>
    %106 = arith.addf %105, %104 : vector<16x128xf32>
    %cst_98 = arith.constant 1.000000e+00 : f32
    %107 = vector.broadcast %cst_98 : f32 to vector<16x128xf32>
    %108 = arith.divf %107, %106 : vector<16x128xf32>
    %c0_99 = arith.constant 0 : index
    %c0_100 = arith.constant 0 : index
    %c0_101 = arith.constant 0 : index
    %109 = vector.load %arg9[%c0_99, %c0_100, %c0_101] : memref<1x16x128xf32, #tpu.memory_space<vmem>>, vector<1x16x128xf32>
    %110 = vector.shape_cast %109 : vector<1x16x128xf32> to vector<16x128xf32>
    %111 = vector.shape_cast %108 : vector<16x128xf32> to vector<1x16x128xf32>
    tpu.vector_store %arg9[%c0_99, %c0_100, %c0_101], %111 {strides = array<i32>} : memref<1x16x128xf32, #tpu.memory_space<vmem>>, vector<1x16x128xf32>,
    return
  }
  func.func @transform_0(%arg0: i32) -> (i32, i32, i32) {
    %c0_i32 = arith.constant 0 : i32
    %c0_i32_0 = arith.constant 0 : i32
    %c0_i32_1 = arith.constant 0 : i32
    return %arg0, %c0_i32, %c0_i32_0 : i32, i32, i32
  }
  func.func @transform_1(%arg0: i32) -> (i32, i32) {
    %c0_i32 = arith.constant 0 : i32
    %c0_i32_0 = arith.constant 0 : i32
    %c0_i32_1 = arith.constant 0 : i32
    return %c0_i32, %c0_i32_0 : i32, i32
  }
  func.func @transform_2(%arg0: i32) -> (i32, i32, i32) {
    %c0_i32 = arith.constant 0 : i32
    %c0_i32_0 = arith.constant 0 : i32
    %c0_i32_1 = arith.constant 0 : i32
    %c0_i32_2 = arith.constant 0 : i32
    return %c0_i32, %c0_i32_0, %c0_i32_1 : i32, i32, i32
  }
  func.func @transform_3(%arg0: i32) -> (i32, i32, i32) {
    %c0_i32 = arith.constant 0 : i32
    %c0_i32_0 = arith.constant 0 : i32
    %c0_i32_1 = arith.constant 0 : i32
    %c0_i32_2 = arith.constant 0 : i32
    return %c0_i32, %c0_i32_0, %c0_i32_1 : i32, i32, i32
  }
  func.func @transform_4(%arg0: i32) -> (i32, i32) {
    %c0_i32 = arith.constant 0 : i32
    %c0_i32_0 = arith.constant 0 : i32
    %c0_i32_1 = arith.constant 0 : i32
    return %c0_i32, %c0_i32_0 : i32, i32
  }
  func.func @transform_5(%arg0: i32) -> (i32, i32) {
    %c0_i32 = arith.constant 0 : i32
    %c0_i32_0 = arith.constant 0 : i32
    %c0_i32_1 = arith.constant 0 : i32
    return %c0_i32, %c0_i32_0 : i32, i32
  }
  func.func @transform_6(%arg0: i32) -> (i32, i32) {
    %c0_i32 = arith.constant 0 : i32
    %c0_i32_0 = arith.constant 0 : i32
    %c0_i32_1 = arith.constant 0 : i32
    return %c0_i32, %c0_i32_0 : i32, i32
  }
  func.func @transform_7(%arg0: i32) -> (i32, i32) {
    %c0_i32 = arith.constant 0 : i32
    %c0_i32_0 = arith.constant 0 : i32
    %c0_i32_1 = arith.constant 0 : i32
    return %c0_i32, %c0_i32_0 : i32, i32
  }
  func.func @transform_8(%arg0: i32) -> (i32, i32, i32) {
    %c0_i32 = arith.constant 0 : i32
    %c0_i32_0 = arith.constant 0 : i32
    %c0_i32_1 = arith.constant 0 : i32
    return %arg0, %c0_i32, %c0_i32_0 : i32, i32, i32
  }
}

</mosaic_0001>

<llo_original>
// kernel: decoder_forward.1
$region0: #{decoder_forward.1}
  #allocation0 [shape = 'u32[]', space=smem, size = 0x4, offset = 0x4, fixed_abs, tag = 'smem constant byte address 0x4 - core index']
  #allocation1 [shape = 'u32[144,128]{1,0:T(1,128)}', space=vmem, size = 0x12000, scoped, tag = 'internal scratch']
  #allocation2 [shape = 'f32[12,160]{1,0:T(8,128)}', space=vmem, size = 0x4000, scoped, tag = 'scratch operand']
  #allocation3 [shape = 'f32[12,144]{1,0:T(8,128)}', space=vmem, size = 0x4000, scoped, tag = 'scratch operand']
  %s0 = inlined_call_operand.vmem [shape: f32[2,12,176], index: 0, kind: input, shape index: {}]
  %s1 = inlined_call_operand.vmem [shape: f32[3,160], index: 1, kind: input, shape index: {}]
  %s2 = inlined_call_operand.vmem [shape: f32[12,12,12], index: 2, kind: input, shape index: {}]
  %s3 = inlined_call_operand.vmem [shape: f32[3,12,1], index: 3, kind: input, shape index: {}]
  %s4 = inlined_call_operand.vmem [shape: f32[24,12], index: 4, kind: input, shape index: {}]
  %s5 = inlined_call_operand.vmem [shape: f32[24,1], index: 5, kind: input, shape index: {}]
  %s6 = inlined_call_operand.vmem [shape: f32[16,24], index: 6, kind: input, shape index: {}]
  %s7 = inlined_call_operand.vmem [shape: f32[16,1], index: 7, kind: input, shape index: {}]
  %s8 = inlined_call_operand.vmem [shape: f32[2,16,128], index: 8, kind: output, shape index: {}]
  %s9 = sld [smem:[#allocation0]]
  $region65: #{decoder_forward.1} parent=0
    _
  %s11 = ssub.s32 1, %s9
  %s12 = scalar_select 0, %s11, %s9
  loop: start=0, step=1, limit=4
  $region2: #{decoder_forward.1} parent=0 // loop_pre_header
    _
  $region3: #{decoder_forward.1} parent=0 // loop_header
    %s14 = sphi 0, %s18
    %p15 = scmp.ge.s32.totalorder %s14, 4
    %s24 = sphi 0, %s26
    %s27 = sphi 0, %s24
    %s28 = sphi 0, %s27
    %s44 = sphi 0, %s28
    %s48 = sphi 0, %s48
    %s50 = sphi 0, %s48
    %s51 = sphi 0, %s50
    %s65 = sphi 0, %s51
    %s69 = sphi 0, %s69
    %s71 = sphi 0, %s69
    %s72 = sphi 0, %s71
    %s86 = sphi 0, %s72
    %s90 = sphi 0, %s90
    %s92 = sphi 0, %s90
    %s93 = sphi 0, %s92
    %s107 = sphi 0, %s93
    %s111 = sphi 0, %s111
    %s113 = sphi 0, %s111
    %s114 = sphi 0, %s113
    %s128 = sphi 0, %s114
    %s132 = sphi 0, %s132
    %s134 = sphi 0, %s132
    %s135 = sphi 0, %s134
    %s149 = sphi 0, %s135
    %s153 = sphi 0, %s153
    %s155 = sphi 0, %s153
    %s156 = sphi 0, %s155
    %s170 = sphi 0, %s156
    %s174 = sphi 0, %s174
    %s176 = sphi 0, %s174
    %s177 = sphi 0, %s176
    %s191 = sphi 0, %s177
    %s197 = sphi 0, %s199
    %s200 = sphi 0, %s197
    %s201 = sphi 0, %s200
    %s217 = sphi 0, %s201
  $region4: #{decoder_forward.1} parent=0 // loop_header_branch
    %17 = sbr.rel (%p15) target = $region8
  $region5: #{decoder_forward.1} parent=0 // loop_body
    %s19 = ssub.s32 %s14, 1
    %s20 = ssub.s32 %s14, 2
    %s21 = sadd.s32 %s14, 1
    %s22 = ssub.s32 %s14, %s21
    %p23 = scmp.eq.s32.totalorder %s22, 0
    %s25 = sadd.s32 %s24, 1
    %s26 = scalar_select %p23, %s24, %s25
    %p29 = pneg %p23
    %p30 = scmp.eq.s32.totalorder %s14, 1
    %p31 = por %p29, %p30
    %p32 = scmp.ne.s32.totalorder %s24, %s27
    %p33 = scmp.eq.s32.totalorder %s14, 0
    %p34 = por %p32, %p33
    %p35 = scmp.ne.s32.totalorder %s24, %s27
    %p36 = scmp.eq.s32.totalorder %s19, 1
    %p37 = por %p35, %p36
    %p38 = scmp.ne.s32.totalorder %s27, %s28
    %p39 = scmp.eq.s32.totalorder %s19, 0
    %p40 = por %p38, %p39
    %p41 = scmp.ne.s32.totalorder %s27, %s28
    %p42 = scmp.eq.s32.totalorder %s20, 1
    %p43 = por %p41, %p42
    %p45 = scmp.ne.s32.totalorder %s28, %s44
    %p46 = scmp.eq.s32.totalorder %s20, 0
    %p47 = por %p45, %p46
    %s49 = sadd.s32 %s48, 1
    %p52 = scmp.eq.s32.totalorder %s14, 1
    %p53 = scmp.ne.s32.totalorder %s48, %s50
    %p54 = scmp.eq.s32.totalorder %s14, 0
    %p55 = por %p53, %p54
    %p56 = scmp.ne.s32.totalorder %s48, %s50
    %p57 = scmp.eq.s32.totalorder %s19, 1
    %p58 = por %p56, %p57
    %p59 = scmp.ne.s32.totalorder %s50, %s51
    %p60 = scmp.eq.s32.totalorder %s19, 0
    %p61 = por %p59, %p60
    %p62 = scmp.ne.s32.totalorder %s50, %s51
    %p63 = scmp.eq.s32.totalorder %s20, 1
    %p64 = por %p62, %p63
    %p66 = scmp.ne.s32.totalorder %s51, %s65
    %p67 = scmp.eq.s32.totalorder %s20, 0
    %p68 = por %p66, %p67
    %s70 = sadd.s32 %s69, 1
    %p73 = scmp.eq.s32.totalorder %s14, 1
    %p74 = scmp.ne.s32.totalorder %s69, %s71
    %p75 = scmp.eq.s32.totalorder %s14, 0
    %p76 = por %p74, %p75
    %p77 = scmp.ne.s32.totalorder %s69, %s71
    %p78 = scmp.eq.s32.totalorder %s19, 1
    %p79 = por %p77, %p78
    %p80 = scmp.ne.s32.totalorder %s71, %s72
    %p81 = scmp.eq.s32.totalorder %s19, 0
    %p82 = por %p80, %p81
    %p83 = scmp.ne.s32.totalorder %s71, %s72
    %p84 = scmp.eq.s32.totalorder %s20, 1
    %p85 = por %p83, %p84
    %p87 = scmp.ne.s32.totalorder %s72, %s86
    %p88 = scmp.eq.s32.totalorder %s20, 0
    %p89 = por %p87, %p88
    %s91 = sadd.s32 %s90, 1
    %p94 = scmp.eq.s32.totalorder %s14, 1
    %p95 = scmp.ne.s32.totalorder %s90, %s92
    %p96 = scmp.eq.s32.totalorder %s14, 0
    %p97 = por %p95, %p96
    %p98 = scmp.ne.s32.totalorder %s90, %s92
    %p99 = scmp.eq.s32.totalorder %s19, 1
    %p100 = por %p98, %p99
    %p101 = scmp.ne.s32.totalorder %s92, %s93
    %p102 = scmp.eq.s32.totalorder %s19, 0
    %p103 = por %p101, %p102
    %p104 = scmp.ne.s32.totalorder %s92, %s93
    %p105 = scmp.eq.s32.totalorder %s20, 1
    %p106 = por %p104, %p105
    %p108 = scmp.ne.s32.totalorder %s93, %s107
    %p109 = scmp.eq.s32.totalorder %s20, 0
    %p110 = por %p108, %p109
    %s112 = sadd.s32 %s111, 1
    %p115 = scmp.eq.s32.totalorder %s14, 1
    %p116 = scmp.ne.s32.totalorder %s111, %s113
    %p117 = scmp.eq.s32.totalorder %s14, 0
    %p118 = por %p116, %p117
    %p119 = scmp.ne.s32.totalorder %s111, %s113
    %p120 = scmp.eq.s32.totalorder %s19, 1
    %p121 = por %p119, %p120
    %p122 = scmp.ne.s32.totalorder %s113, %s114
    %p123 = scmp.eq.s32.totalorder %s19, 0
    %p124 = por %p122, %p123
    %p125 = scmp.ne.s32.totalorder %s113, %s114
    %p126 = scmp.eq.s32.totalorder %s20, 1
    %p127 = por %p125, %p126
    %p129 = scmp.ne.s32.totalorder %s114, %s128
    %p130 = scmp.eq.s32.totalorder %s20, 0
    %p131 = por %p129, %p130
    %s133 = sadd.s32 %s132, 1
    %p136 = scmp.eq.s32.totalorder %s14, 1
    %p137 = scmp.ne.s32.totalorder %s132, %s134
    %p138 = scmp.eq.s32.totalorder %s14, 0
    %p139 = por %p137, %p138
    %p140 = scmp.ne.s32.totalorder %s132, %s134
    %p141 = scmp.eq.s32.totalorder %s19, 1
    %p142 = por %p140, %p141
    %p143 = scmp.ne.s32.totalorder %s134, %s135
    %p144 = scmp.eq.s32.totalorder %s19, 0
    %p145 = por %p143, %p144
    %p146 = scmp.ne.s32.totalorder %s134, %s135
    %p147 = scmp.eq.s32.totalorder %s20, 1
    %p148 = por %p146, %p147
    %p150 = scmp.ne.s32.totalorder %s135, %s149
    %p151 = scmp.eq.s32.totalorder %s20, 0
    %p152 = por %p150, %p151
    %s154 = sadd.s32 %s153, 1
    %p157 = scmp.eq.s32.totalorder %s14, 1
    %p158 = scmp.ne.s32.totalorder %s153, %s155
    %p159 = scmp.eq.s32.totalorder %s14, 0
    %p160 = por %p158, %p159
    %p161 = scmp.ne.s32.totalorder %s153, %s155
    %p162 = scmp.eq.s32.totalorder %s19, 1
    %p163 = por %p161, %p162
    %p164 = scmp.ne.s32.totalorder %s155, %s156
    %p165 = scmp.eq.s32.totalorder %s19, 0
    %p166 = por %p164, %p165
    %p167 = scmp.ne.s32.totalorder %s155, %s156
    %p168 = scmp.eq.s32.totalorder %s20, 1
    %p169 = por %p167, %p168
    %p171 = scmp.ne.s32.totalorder %s156, %s170
    %p172 = scmp.eq.s32.totalorder %s20, 0
    %p173 = por %p171, %p172
    %s175 = sadd.s32 %s174, 1
    %p178 = scmp.eq.s32.totalorder %s14, 1
    %p179 = scmp.ne.s32.totalorder %s174, %s176
    %p180 = scmp.eq.s32.totalorder %s14, 0
    %p181 = por %p179, %p180
    %p182 = scmp.ne.s32.totalorder %s174, %s176
    %p183 = scmp.eq.s32.totalorder %s19, 1
    %p184 = por %p182, %p183
    %p185 = scmp.ne.s32.totalorder %s176, %s177
    %p186 = scmp.eq.s32.totalorder %s19, 0
    %p187 = por %p185, %p186
    %p188 = scmp.ne.s32.totalorder %s176, %s177
    %p189 = scmp.eq.s32.totalorder %s20, 1
    %p190 = por %p188, %p189
    %p192 = scmp.ne.s32.totalorder %s177, %s191
    %p193 = scmp.eq.s32.totalorder %s20, 0
    %p194 = por %p192, %p193
    %s195 = ssub.s32 %s14, %s21
    %p196 = scmp.eq.s32.totalorder %s195, 0
    %s198 = sadd.s32 %s197, 1
    %s199 = scalar_select %p196, %s197, %s198
    %p202 = pneg %p196
    %p203 = scmp.eq.s32.totalorder %s14, 1
    %p204 = por %p202, %p203
    %p205 = scmp.ne.s32.totalorder %s197, %s200
    %p206 = scmp.eq.s32.totalorder %s14, 0
    %p207 = por %p205, %p206
    %p208 = scmp.ne.s32.totalorder %s197, %s200
    %p209 = scmp.eq.s32.totalorder %s19, 1
    %p210 = por %p208, %p209
    %p211 = scmp.ne.s32.totalorder %s200, %s201
    %p212 = scmp.eq.s32.totalorder %s19, 0
    %p213 = por %p211, %p212
    %p214 = scmp.ne.s32.totalorder %s200, %s201
    %p215 = scmp.eq.s32.totalorder %s20, 1
    %p216 = por %p214, %p215
    %p218 = scmp.ne.s32.totalorder %s201, %s217
    %p219 = scmp.eq.s32.totalorder %s20, 0
    %p220 = por %p218, %p219
    %p221 = scmp.le.s32.totalorder 1, %s14
    %p222 = scmp.lt.s32.totalorder %s14, 3
    %p223 = pnand %p221, %p222
    %p224 = pneg %p223
    // Predicated region
    $region9: #{decoder_forward.1} parent=5 // pred_check
      _
    $region10: #{decoder_forward.1} parent=5 // pred_check_branch
      %226 = sbr.rel (%p223) target = $region12
    $region11: #{decoder_forward.1} parent=5 // pred_region
      %s227 = ssub.s32 %s14, 1
      // Predicated region
      $region13: #{decoder_forward.1} parent=11 // pred_check
        %p228 = pneg %p61
      $region14: #{decoder_forward.1} parent=11 // pred_check_branch
        %230 = sbr.rel (%p228) target = $region16
      $region15: #{decoder_forward.1} parent=11 // pred_region
        _
      $region16: #{decoder_forward.1} parent=11 // pred_fallthru
        _
      // Predicated region
      $region17: #{decoder_forward.1} parent=11 // pred_check
        %p231 = pneg %p82
      $region18: #{decoder_forward.1} parent=11 // pred_check_branch
        %233 = sbr.rel (%p231) target = $region20
      $region19: #{decoder_forward.1} parent=11 // pred_region
        _
      $region20: #{decoder_forward.1} parent=11 // pred_fallthru
        _
      // Predicated region
      $region21: #{decoder_forward.1} parent=11 // pred_check
        %p234 = pneg %p103
      $region22: #{decoder_forward.1} parent=11 // pred_check_branch
        %236 = sbr.rel (%p234) target = $region24
      $region23: #{decoder_forward.1} parent=11 // pred_region
        _
      $region24: #{decoder_forward.1} parent=11 // pred_fallthru
        _
      // Predicated region
      $region25: #{decoder_forward.1} parent=11 // pred_check
        %p237 = pneg %p124
      $region26: #{decoder_forward.1} parent=11 // pred_check_branch
        %239 = sbr.rel (%p237) target = $region28
      $region27: #{decoder_forward.1} parent=11 // pred_region
        _
      $region28: #{decoder_forward.1} parent=11 // pred_fallthru
        _
      // Predicated region
      $region29: #{decoder_forward.1} parent=11 // pred_check
        %p240 = pneg %p145
      $region30: #{decoder_forward.1} parent=11 // pred_check_branch
        %242 = sbr.rel (%p240) target = $region32
      $region31: #{decoder_forward.1} parent=11 // pred_region
        _
      $region32: #{decoder_forward.1} parent=11 // pred_fallthru
        _
      // Predicated region
      $region33: #{decoder_forward.1} parent=11 // pred_check
        %p243 = pneg %p166
      $region34: #{decoder_forward.1} parent=11 // pred_check_branch
        %245 = sbr.rel (%p243) target = $region36
      $region35: #{decoder_forward.1} parent=11 // pred_region
        _
      $region36: #{decoder_forward.1} parent=11 // pred_fallthru
        _
      // Predicated region
      $region37: #{decoder_forward.1} parent=11 // pred_check
        %p246 = pneg %p187
      $region38: #{decoder_forward.1} parent=11 // pred_check_branch
        %248 = sbr.rel (%p246) target = $region40
      $region39: #{decoder_forward.1} parent=11 // pred_region
        _
      $region40: #{decoder_forward.1} parent=11 // pred_fallthru
        _
    $region12: #{decoder_forward.1} parent=5 // pred_fallthru
      _
    %p249 = scmp.lt.s32.totalorder %s14, 2
    // Predicated region
    $region41: #{decoder_forward.1} parent=5 // pred_check
      %p250 = pneg %p249
    $region42: #{decoder_forward.1} parent=5 // pred_check_branch
      %252 = sbr.rel (%p250) target = $region44
    $region43: #{decoder_forward.1} parent=5 // pred_region
      // Predicated region
      $region45: #{decoder_forward.1} parent=43 // pred_check
        %p253 = pneg %p34
      $region46: #{decoder_forward.1} parent=43 // pred_check_branch
        %255 = sbr.rel (%p253) target = $region48
      $region47: #{decoder_forward.1} parent=43 // pred_region
        %p256 = scmp.lt.s32.totalorder %s14, 1
        %s257 = scalar_select %p256, %s14, 1
        %s258 = smul.addr %s257, 4
        %s259 = smul.addr %s258, 8
        %s260 = scalar_lea.vmem %s0, %s259
      $region48: #{decoder_forward.1} parent=43 // pred_fallthru
        _
    $region44: #{decoder_forward.1} parent=5 // pred_fallthru
      _
    %p261 = scmp.le.s32.totalorder 1, %s14
    %p262 = scmp.lt.s32.totalorder %s14, 3
    %p263 = pnand %p261, %p262
    %p264 = pneg %p263
    // Predicated region
    $region49: #{decoder_forward.1} parent=5 // pred_check
      _
    $region50: #{decoder_forward.1} parent=5 // pred_check_branch
      %266 = sbr.rel (%p263) target = $region52
    $region51: #{decoder_forward.1} parent=5 // pred_region
      %s267 = ssub.s32 %s14, 1
      %p268 = scmp.lt.s32.totalorder %s19, 1
      %s269 = scalar_select %p268, %s19, 1
      %s270 = smul.addr %s269, 4
      %s271 = smul.addr %s270, 8
      %s272 = scalar_lea.vmem %s0, %s271
      %p273 = pneg %p40
      %p274 = pneg %p37
      %p275 = pneg %p61
      %p276 = pneg %p58
      %p277 = pneg %p82
      %p278 = pneg %p79
      %p279 = pneg %p103
      %p280 = pneg %p100
      %p281 = pneg %p124
      %p282 = pneg %p121
      %p283 = pneg %p145
      %p284 = pneg %p142
      %p285 = pneg %p166
      %p286 = pneg %p163
      %p287 = pneg %p187
      %p288 = pneg %p184
      %p289 = pneg %p213
      %p290 = pneg %p210
      %p291 = scmp.lt.s32.totalorder %s19, 1
      %s292 = scalar_select %p291, %s19, 1
      %s293 = smul.addr %s292, 2
      %s294 = smul.addr %s293, 8
      %s295 = scalar_lea.vmem %s8, %s294
      %p296 = scmp.lt.s32.totalorder %s19, 1
      %s297 = scalar_select %p296, %s19, 1
      %s298 = smul.addr %s297, 4
      %s299 = smul.addr %s298, 8
      %s300 = scalar_lea.vmem %s0, %s299
      %p301 = scmp.lt.s32.totalorder %s19, 1
      %s302 = scalar_select %p301, %s19, 1
      %s303 = smul.addr %s302, 2
      %s304 = smul.addr %s303, 8
      %s305 = scalar_lea.vmem %s8, %s304
      %v306 = vld [vmem:[%s1] ss:$4 sm:$0x3]
      %v307 = vld [vmem:[%s2] sm:$0xff]
      %v308 = vld [vmem:[%s2 + $0x8] sm:$0xf]
      %v309 = vld [vmem:[%s300] sm:$0xff]
      %v310 = vld [vmem:[%s300 + $0x8] sm:$0xff]
      %v311 = vld [vmem:[%s300 + $0x10] sm:$0xf]
      %v312 = vld [vmem:[%s300 + $0x18] sm:$0xf]
      %s313 = scalar_lea.vmem %s2, 16
      %v314 = vld [vmem:[%s313] sm:$0xff]
      %v315 = vld [vmem:[%s313 + $0x8] sm:$0xf]
      %320 = vrot.lane.b32.xlu0 %v309, 127
      %v321 = vpop.permute.xlu0 %320
      %322 = vrot.lane.b32.xlu0 %v310, 127
      %v323 = vpop.permute.xlu0 %322
      %324 = vrot.lane.b32.xlu0 %v311, 127
      %v325 = vpop.permute.xlu0 %324
      %326 = vrot.lane.b32.xlu0 %v312, 127
      %v327 = vpop.permute.xlu0 %326
      %vm328 = vcmask 1039360
      %v329 = vsel %vm328, %v321, %v323
      %v330 = vsel %vm328, %v325, %v327
      %vm333 = vcmask 97280
      %v335 = vsel %vm333, %v314, 0
      %v338 = vsel %vm333, %v315, 0
      %vm340 = vcmask 1043456
      %v341 = vsel %vm340, %v330, 0
      %v343 = vsel %vm340, %v327, 0
      %345 = vmatprep.subr.mxu0 0.0
      %346 = vmatpush1.msra.mxu0 0.0
      %347 = vmatprep.subr.mxu0 0.0
      %348 = vmatpush1.msra.mxu0 0.0
      %349 = vmatprep.subr.mxu0 0.0
      %350 = vmatpush1.msra.mxu0 0.0
      %351 = vmatprep.subr.mxu0 0.0
      %352 = vmatpush1.msra.mxu0 0.0
      %353 = vmatprep.subr.mxu0 0.0
      %354 = vmatpush1.msra.mxu0 0.0
      %355 = vmatprep.subr.mxu0 0.0
      %356 = vmatpush1.msra.mxu0 0.0
      %357 = vmatprep.subr.mxu0 0.0
      %358 = vmatpush1.msra.mxu0 0.0
      %359 = vmatprep.subr.mxu0 0.0
      %360 = vmatpush1.msra.mxu0 0.0
      %361 = vmatprep.subr.mxu0 0.0
      %362 = vmatpush1.msra.mxu0 0.0
      %363 = vmatprep.subr.mxu0 0.0
      %364 = vmatpush1.msra.mxu0 0.0
      %365 = vmatprep.subr.mxu0 0.0
      %366 = vmatpush1.msra.mxu0 0.0
      %367 = vmatprep.subr.mxu0 0.0
      %368 = vmatpush1.msra.mxu0 0.0
      %369 = vmatprep.subr.mxu0 0.0
      %370 = vmatpush1.msra.mxu0 0.0
      %371 = vmatprep.subr.mxu0 0.0
      %372 = vmatpush1.msra.mxu0 0.0
      %373 = vmatprep.subr.mxu0 %v343
      %374 = vmatpush1.msra.mxu0 %v341
      %375 = vmatprep.subr.mxu0 %v323
      %376 = vmatpush1.msra.mxu0 %v329
      %377 = vmatprep.subr.mxu0 0.0
      %378 = vmatpush2.msra.mxu0 0.0
      %379 = vmatprep.subr.mxu0 0.0
      %380 = vmatpush2.msra.mxu0 0.0
      %381 = vmatprep.subr.mxu0 0.0
      %382 = vmatpush2.msra.mxu0 0.0
      %383 = vmatprep.subr.mxu0 0.0
      %384 = vmatpush2.msra.mxu0 0.0
      %385 = vmatprep.subr.mxu0 0.0
      %386 = vmatpush2.msra.mxu0 0.0
      %387 = vmatprep.subr.mxu0 0.0
      %388 = vmatpush2.msra.mxu0 0.0
      %389 = vmatprep.subr.mxu0 0.0
      %390 = vmatpush2.msra.mxu0 0.0
      %391 = vmatprep.subr.mxu0 0.0
      %392 = vmatpush2.msra.mxu0 0.0
      %393 = vmatprep.subr.mxu0 0.0
      %394 = vmatpush2.msra.mxu0 0.0
      %395 = vmatprep.subr.mxu0 0.0
      %396 = vmatpush2.msra.mxu0 0.0
      %397 = vmatprep.subr.mxu0 0.0
      %398 = vmatpush2.msra.mxu0 0.0
      %399 = vmatprep.subr.mxu0 0.0
      %400 = vmatpush2.msra.mxu0 0.0
      %401 = vmatprep.subr.mxu0 0.0
      %402 = vmatpush2.msra.mxu0 0.0
      %403 = vmatprep.subr.mxu0 0.0
      %404 = vmatpush2.msra.mxu0 0.0
      %405 = vmatprep.subr.mxu0 0.0
      %406 = vmatpush2.msra.mxu0 0.0
      %407 = vmatprep.subr.mxu0 0.0
      %408 = vmatpush2.msra.mxu0 0.0
      %409 = vmatprep.mubr.f32.mxu0 0.0
      %410 = vmatmul.mubr.f32.gmra.mxu0 %v335
      %v411 = vpop.f32.mrf.mxu0
      %v412 = vadd.f32 0.0, %v411
      %v413 = vpop.f32.mrf.mxu0
      %v414 = vadd.f32 0.0, %v413
      %415 = vmatprep.mubr.f32.mxu0 0.0
      %416 = vmatmul.mubr.f32.gmra.mxu0 %v338
      %v417 = vpop.f32.mrf.mxu0
      %v418 = vadd.f32 0.0, %v417
      %v419 = vpop.f32.mrf.mxu0
      %v420 = vadd.f32 0.0, %v419
      %421 = vdwg.mxu0
      %v423 = vsel %vm333, %v307, 0
      %v426 = vsel %vm333, %v308, 0
      %v428 = vsel %vm340, %v311, 0
      %v430 = vsel %vm340, %v312, 0
      %432 = vmatprep.subr.mxu0 0.0
      %433 = vmatpush1.msra.mxu0 0.0
      %434 = vmatprep.subr.mxu0 0.0
      %435 = vmatpush1.msra.mxu0 0.0
      %436 = vmatprep.subr.mxu0 0.0
      %437 = vmatpush1.msra.mxu0 0.0
      %438 = vmatprep.subr.mxu0 0.0
      %439 = vmatpush1.msra.mxu0 0.0
      %440 = vmatprep.subr.mxu0 0.0
      %441 = vmatpush1.msra.mxu0 0.0
      %442 = vmatprep.subr.mxu0 0.0
      %443 = vmatpush1.msra.mxu0 0.0
      %444 = vmatprep.subr.mxu0 0.0
      %445 = vmatpush1.msra.mxu0 0.0
      %446 = vmatprep.subr.mxu0 0.0
      %447 = vmatpush1.msra.mxu0 0.0
      %448 = vmatprep.subr.mxu0 0.0
      %449 = vmatpush1.msra.mxu0 0.0
      %450 = vmatprep.subr.mxu0 0.0
      %451 = vmatpush1.msra.mxu0 0.0
      %452 = vmatprep.subr.mxu0 0.0
      %453 = vmatpush1.msra.mxu0 0.0
      %454 = vmatprep.subr.mxu0 0.0
      %455 = vmatpush1.msra.mxu0 0.0
      %456 = vmatprep.subr.mxu0 0.0
      %457 = vmatpush1.msra.mxu0 0.0
      %458 = vmatprep.subr.mxu0 0.0
      %459 = vmatpush1.msra.mxu0 0.0
      %460 = vmatprep.subr.mxu0 %v430
      %461 = vmatpush1.msra.mxu0 %v428
      %462 = vmatprep.subr.mxu0 %v310
      %463 = vmatpush1.msra.mxu0 %v309
      %464 = vmatprep.subr.mxu0 0.0
      %465 = vmatpush2.msra.mxu0 0.0
      %466 = vmatprep.subr.mxu0 0.0
      %467 = vmatpush2.msra.mxu0 0.0
      %468 = vmatprep.subr.mxu0 0.0
      %469 = vmatpush2.msra.mxu0 0.0
      %470 = vmatprep.subr.mxu0 0.0
      %471 = vmatpush2.msra.mxu0 0.0
      %472 = vmatprep.subr.mxu0 0.0
      %473 = vmatpush2.msra.mxu0 0.0
      %474 = vmatprep.subr.mxu0 0.0
      %475 = vmatpush2.msra.mxu0 0.0
      %476 = vmatprep.subr.mxu0 0.0
      %477 = vmatpush2.msra.mxu0 0.0
      %478 = vmatprep.subr.mxu0 0.0
      %479 = vmatpush2.msra.mxu0 0.0
      %480 = vmatprep.subr.mxu0 0.0
      %481 = vmatpush2.msra.mxu0 0.0
      %482 = vmatprep.subr.mxu0 0.0
      %483 = vmatpush2.msra.mxu0 0.0
      %484 = vmatprep.subr.mxu0 0.0
      %485 = vmatpush2.msra.mxu0 0.0
      %486 = vmatprep.subr.mxu0 0.0
      %487 = vmatpush2.msra.mxu0 0.0
      %488 = vmatprep.subr.mxu0 0.0
      %489 = vmatpush2.msra.mxu0 0.0
      %490 = vmatprep.subr.mxu0 0.0
      %491 = vmatpush2.msra.mxu0 0.0
      %492 = vmatprep.subr.mxu0 0.0
      %493 = vmatpush2.msra.mxu0 0.0
      %494 = vmatprep.subr.mxu0 0.0
      %495 = vmatpush2.msra.mxu0 0.0
      %496 = vmatprep.mubr.f32.mxu0 0.0
      %497 = vmatmul.mubr.f32.gmra.mxu0 %v423
      %v498 = vpop.f32.mrf.mxu0
      %v499 = vadd.f32 %v412, %v498
      %v500 = vpop.f32.mrf.mxu0
      %v501 = vadd.f32 %v414, %v500
      %502 = vmatprep.mubr.f32.mxu0 0.0
      %503 = vmatmul.mubr.f32.gmra.mxu0 %v426
      %v504 = vpop.f32.mrf.mxu0
      %v505 = vadd.f32 %v418, %v504
      %v506 = vpop.f32.mrf.mxu0
      %v507 = vadd.f32 %v420, %v506
      %508 = vdwg.mxu0
      %s509 = scalar_lea.vmem %s2, 32
      %v510 = vld [vmem:[%s509] sm:$0xff]
      %v511 = vld [vmem:[%s509 + $0x8] sm:$0xf]
      %512 = vrot.lane.b32.xlu0 %v309, 120
      %v513 = vpop.permute.xlu0 %512
      %514 = vrot.lane.b32.xlu0 %v310, 120
      %v515 = vpop.permute.xlu0 %514
      %516 = vrot.lane.b32.xlu0 %v311, 120
      %v517 = vpop.permute.xlu0 %516
      %518 = vrot.lane.b32.xlu0 %v312, 120
      %v519 = vpop.permute.xlu0 %518
      %vm520 = vcmask 982016
      %v521 = vsel %vm520, %v513, %v515
      %v522 = vsel %vm520, %v517, %v519
      %v526 = vsel %vm333, %v510, 0
      %v529 = vsel %vm333, %v511, 0
      %v531 = vsel %vm340, %v522, 0
      %v533 = vsel %vm340, %v519, 0
      %535 = vmatprep.subr.mxu0 0.0
      %536 = vmatpush1.msra.mxu0 0.0
      %537 = vmatprep.subr.mxu0 0.0
      %538 = vmatpush1.msra.mxu0 0.0
      %539 = vmatprep.subr.mxu0 0.0
      %540 = vmatpush1.msra.mxu0 0.0
      %541 = vmatprep.subr.mxu0 0.0
      %542 = vmatpush1.msra.mxu0 0.0
      %543 = vmatprep.subr.mxu0 0.0
      %544 = vmatpush1.msra.mxu0 0.0
      %545 = vmatprep.subr.mxu0 0.0
      %546 = vmatpush1.msra.mxu0 0.0
      %547 = vmatprep.subr.mxu0 0.0
      %548 = vmatpush1.msra.mxu0 0.0
      %549 = vmatprep.subr.mxu0 0.0
      %550 = vmatpush1.msra.mxu0 0.0
      %551 = vmatprep.subr.mxu0 0.0
      %552 = vmatpush1.msra.mxu0 0.0
      %553 = vmatprep.subr.mxu0 0.0
      %554 = vmatpush1.msra.mxu0 0.0
      %555 = vmatprep.subr.mxu0 0.0
      %556 = vmatpush1.msra.mxu0 0.0
      %557 = vmatprep.subr.mxu0 0.0
      %558 = vmatpush1.msra.mxu0 0.0
      %559 = vmatprep.subr.mxu0 0.0
      %560 = vmatpush1.msra.mxu0 0.0
      %561 = vmatprep.subr.mxu0 0.0
      %562 = vmatpush1.msra.mxu0 0.0
      %563 = vmatprep.subr.mxu0 %v533
      %564 = vmatpush1.msra.mxu0 %v531
      %565 = vmatprep.subr.mxu0 %v515
      %566 = vmatpush1.msra.mxu0 %v521
      %567 = vmatprep.subr.mxu0 0.0
      %568 = vmatpush2.msra.mxu0 0.0
      %569 = vmatprep.subr.mxu0 0.0
      %570 = vmatpush2.msra.mxu0 0.0
      %571 = vmatprep.subr.mxu0 0.0
      %572 = vmatpush2.msra.mxu0 0.0
      %573 = vmatprep.subr.mxu0 0.0
      %574 = vmatpush2.msra.mxu0 0.0
      %575 = vmatprep.subr.mxu0 0.0
      %576 = vmatpush2.msra.mxu0 0.0
      %577 = vmatprep.subr.mxu0 0.0
      %578 = vmatpush2.msra.mxu0 0.0
      %579 = vmatprep.subr.mxu0 0.0
      %580 = vmatpush2.msra.mxu0 0.0
      %581 = vmatprep.subr.mxu0 0.0
      %582 = vmatpush2.msra.mxu0 0.0
      %583 = vmatprep.subr.mxu0 0.0
      %584 = vmatpush2.msra.mxu0 0.0
      %585 = vmatprep.subr.mxu0 0.0
      %586 = vmatpush2.msra.mxu0 0.0
      %587 = vmatprep.subr.mxu0 0.0
      %588 = vmatpush2.msra.mxu0 0.0
      %589 = vmatprep.subr.mxu0 0.0
      %590 = vmatpush2.msra.mxu0 0.0
      %591 = vmatprep.subr.mxu0 0.0
      %592 = vmatpush2.msra.mxu0 0.0
      %593 = vmatprep.subr.mxu0 0.0
      %594 = vmatpush2.msra.mxu0 0.0
      %595 = vmatprep.subr.mxu0 0.0
      %596 = vmatpush2.msra.mxu0 0.0
      %597 = vmatprep.subr.mxu0 0.0
      %598 = vmatpush2.msra.mxu0 0.0
      %599 = vmatprep.mubr.f32.mxu0 0.0
      %600 = vmatmul.mubr.f32.gmra.mxu0 %v526
      %v601 = vpop.f32.mrf.mxu0
      %v602 = vadd.f32 0.0, %v601
      %v603 = vpop.f32.mrf.mxu0
      %v604 = vadd.f32 0.0, %v603
      %605 = vmatprep.mubr.f32.mxu0 0.0
      %606 = vmatmul.mubr.f32.gmra.mxu0 %v529
      %v607 = vpop.f32.mrf.mxu0
      %v608 = vadd.f32 0.0, %v607
      %v609 = vpop.f32.mrf.mxu0
      %v610 = vadd.f32 0.0, %v609
      %611 = vdwg.mxu0
      %v612 = vadd.f32 %v499, %v602
      %v613 = vadd.f32 %v501, %v604
      %v614 = vadd.f32 %v505, %v608
      %v615 = vadd.f32 %v507, %v610
      %s616 = scalar_lea.vmem %s2, 48
      %v617 = vld [vmem:[%s616] sm:$0xff]
      %v618 = vld [vmem:[%s616 + $0x8] sm:$0xf]
      %619 = vrot.lane.b32.xlu0 %v309, 119
      %v620 = vpop.permute.xlu0 %619
      %621 = vrot.lane.b32.xlu0 %v310, 119
      %v622 = vpop.permute.xlu0 %621
      %623 = vrot.lane.b32.xlu0 %v311, 119
      %v624 = vpop.permute.xlu0 %623
      %625 = vrot.lane.b32.xlu0 %v312, 119
      %v626 = vpop.permute.xlu0 %625
      %vm627 = vcmask 973824
      %v628 = vsel %vm627, %v620, %v622
      %v629 = vsel %vm627, %v624, %v626
      %v633 = vsel %vm333, %v617, 0
      %v636 = vsel %vm333, %v618, 0
      %v638 = vsel %vm340, %v629, 0
      %v640 = vsel %vm340, %v626, 0
      %642 = vmatprep.subr.mxu0 0.0
      %643 = vmatpush1.msra.mxu0 0.0
      %644 = vmatprep.subr.mxu0 0.0
      %645 = vmatpush1.msra.mxu0 0.0
      %646 = vmatprep.subr.mxu0 0.0
      %647 = vmatpush1.msra.mxu0 0.0
      %648 = vmatprep.subr.mxu0 0.0
      %649 = vmatpush1.msra.mxu0 0.0
      %650 = vmatprep.subr.mxu0 0.0
      %651 = vmatpush1.msra.mxu0 0.0
      %652 = vmatprep.subr.mxu0 0.0
      %653 = vmatpush1.msra.mxu0 0.0
      %654 = vmatprep.subr.mxu0 0.0
      %655 = vmatpush1.msra.mxu0 0.0
      %656 = vmatprep.subr.mxu0 0.0
      %657 = vmatpush1.msra.mxu0 0.0
      %658 = vmatprep.subr.mxu0 0.0
      %659 = vmatpush1.msra.mxu0 0.0
      %660 = vmatprep.subr.mxu0 0.0
      %661 = vmatpush1.msra.mxu0 0.0
      %662 = vmatprep.subr.mxu0 0.0
      %663 = vmatpush1.msra.mxu0 0.0
      %664 = vmatprep.subr.mxu0 0.0
      %665 = vmatpush1.msra.mxu0 0.0
      %666 = vmatprep.subr.mxu0 0.0
      %667 = vmatpush1.msra.mxu0 0.0
      %668 = vmatprep.subr.mxu0 0.0
      %669 = vmatpush1.msra.mxu0 0.0
      %670 = vmatprep.subr.mxu0 %v640
      %671 = vmatpush1.msra.mxu0 %v638
      %672 = vmatprep.subr.mxu0 %v622
      %673 = vmatpush1.msra.mxu0 %v628
      %674 = vmatprep.subr.mxu0 0.0
      %675 = vmatpush2.msra.mxu0 0.0
      %676 = vmatprep.subr.mxu0 0.0
      %677 = vmatpush2.msra.mxu0 0.0
      %678 = vmatprep.subr.mxu0 0.0
      %679 = vmatpush2.msra.mxu0 0.0
      %680 = vmatprep.subr.mxu0 0.0
      %681 = vmatpush2.msra.mxu0 0.0
      %682 = vmatprep.subr.mxu0 0.0
      %683 = vmatpush2.msra.mxu0 0.0
      %684 = vmatprep.subr.mxu0 0.0
      %685 = vmatpush2.msra.mxu0 0.0
      %686 = vmatprep.subr.mxu0 0.0
      %687 = vmatpush2.msra.mxu0 0.0
      %688 = vmatprep.subr.mxu0 0.0
      %689 = vmatpush2.msra.mxu0 0.0
      %690 = vmatprep.subr.mxu0 0.0
      %691 = vmatpush2.msra.mxu0 0.0
      %692 = vmatprep.subr.mxu0 0.0
      %693 = vmatpush2.msra.mxu0 0.0
      %694 = vmatprep.subr.mxu0 0.0
      %695 = vmatpush2.msra.mxu0 0.0
      %696 = vmatprep.subr.mxu0 0.0
      %697 = vmatpush2.msra.mxu0 0.0
      %698 = vmatprep.subr.mxu0 0.0
      %699 = vmatpush2.msra.mxu0 0.0
      %700 = vmatprep.subr.mxu0 0.0
      %701 = vmatpush2.msra.mxu0 0.0
      %702 = vmatprep.subr.mxu0 0.0
      %703 = vmatpush2.msra.mxu0 0.0
      %704 = vmatprep.subr.mxu0 0.0
      %705 = vmatpush2.msra.mxu0 0.0
      %706 = vmatprep.mubr.f32.mxu0 0.0
      %707 = vmatmul.mubr.f32.gmra.mxu0 %v633
      %v708 = vpop.f32.mrf.mxu0
      %v709 = vadd.f32 0.0, %v708
      %v710 = vpop.f32.mrf.mxu0
      %v711 = vadd.f32 0.0, %v710
      %712 = vmatprep.mubr.f32.mxu0 0.0
      %713 = vmatmul.mubr.f32.gmra.mxu0 %v636
      %v714 = vpop.f32.mrf.mxu0
      %v715 = vadd.f32 0.0, %v714
      %v716 = vpop.f32.mrf.mxu0
      %v717 = vadd.f32 0.0, %v716
      %718 = vdwg.mxu0
      %v719 = vadd.f32 %v612, %v709
      %v720 = vadd.f32 %v613, %v711
      %v721 = vadd.f32 %v614, %v715
      %v722 = vadd.f32 %v615, %v717
      %v723 = vld [vmem:[%s3] sm:$0xff]
      %v724 = vld [vmem:[%s3 + $0x8] sm:$0xf]
      %726 = vset.pattern.permute.xlu0 0
      %727 = vperm.xlu0 %726, %v723
      %v728 = vpop.permute.xlu0 %727
      %731 = vset.pattern.permute.xlu0 0
      %732 = vperm.xlu0 %731, %v724
      %v733 = vpop.permute.xlu0 %732
      %v735 = vadd.f32 %v719, %v728
      %v736 = vadd.f32 %v720, %v728
      %v737 = vadd.f32 %v721, %v733
      %v738 = vadd.f32 %v722, %v733
      %v739 = vmax.f32 %v735, 0.0
      %v740 = vmax.f32 %v736, 0.0
      %v741 = vmax.f32 %v737, 0.0
      %v742 = vmax.f32 %v738, 0.0
      %v744 = vlaneseq
      %v745 = vshrl.u32 %v744, 7
      %v746 = vsub.s32 0, %v745
      %v747 = vrot.slane %v306, %v746
      %v748 = vlaneseq
      %v749 = vshrl.u32 %v748, 7
      %v750 = vsub.s32 1, %v749
      %v751 = vrot.slane %v306, %v750
      %v754 = vmul.f32 %v739, %v747
      %v755 = vmul.f32 %v740, %v751
      %v756 = vmul.f32 %v741, %v747
      %v757 = vmul.f32 %v742, %v751
      %758 = vst [vmem:[#allocation2] sm:$0xff] %v754
      %vm759 = vcmask 261120
      %760 = vst.msk [vmem:[#allocation2 + $0x8] sm:$0xff] %vm759, %v755
      %761 = vst [vmem:[#allocation2 + $0x10] sm:$0xf] %v756
      %vm762 = vcmask 257024
      %763 = vst.msk [vmem:[#allocation2 + $0x18] sm:$0xf] %vm762, %v757
      %s764 = scalar_lea.vmem %s1, 1
      %v765 = vld [vmem:[%s764] ss:$4 sm:$0x3]
      %s766 = scalar_lea.vmem %s2, 64
      %v767 = vld [vmem:[%s766] sm:$0xff]
      %v768 = vld [vmem:[%s766 + $0x8] sm:$0xf]
      %v769 = vld [vmem:[#allocation2] sm:$0xff]
      %v770 = vld [vmem:[#allocation2 + $0x8] sm:$0xff]
      %v771 = vld [vmem:[#allocation2 + $0x10] sm:$0xf]
      %v772 = vld [vmem:[#allocation2 + $0x18] sm:$0xf]
      %s773 = scalar_lea.vmem %s2, 80
      %v774 = vld [vmem:[%s773] sm:$0xff]
      %v775 = vld [vmem:[%s773 + $0x8] sm:$0xf]
      %780 = vrot.lane.b32.xlu0 %v769, 127
      %v781 = vpop.permute.xlu0 %780
      %782 = vrot.lane.b32.xlu0 %v770, 127
      %v783 = vpop.permute.xlu0 %782
      %784 = vrot.lane.b32.xlu0 %v771, 127
      %v785 = vpop.permute.xlu0 %784
      %786 = vrot.lane.b32.xlu0 %v772, 127
      %v787 = vpop.permute.xlu0 %786
      %v788 = vsel %vm328, %v781, %v783
      %v789 = vsel %vm328, %v785, %v787
      %v793 = vsel %vm333, %v774, 0
      %v796 = vsel %vm333, %v775, 0
      %v798 = vsel %vm340, %v789, 0
      %v800 = vsel %vm340, %v787, 0
      %802 = vmatprep.subr.mxu0 0.0
      %803 = vmatpush1.msra.mxu0 0.0
      %804 = vmatprep.subr.mxu0 0.0
      %805 = vmatpush1.msra.mxu0 0.0
      %806 = vmatprep.subr.mxu0 0.0
      %807 = vmatpush1.msra.mxu0 0.0
      %808 = vmatprep.subr.mxu0 0.0
      %809 = vmatpush1.msra.mxu0 0.0
      %810 = vmatprep.subr.mxu0 0.0
      %811 = vmatpush1.msra.mxu0 0.0
      %812 = vmatprep.subr.mxu0 0.0
      %813 = vmatpush1.msra.mxu0 0.0
      %814 = vmatprep.subr.mxu0 0.0
      %815 = vmatpush1.msra.mxu0 0.0
      %816 = vmatprep.subr.mxu0 0.0
      %817 = vmatpush1.msra.mxu0 0.0
      %818 = vmatprep.subr.mxu0 0.0
      %819 = vmatpush1.msra.mxu0 0.0
      %820 = vmatprep.subr.mxu0 0.0
      %821 = vmatpush1.msra.mxu0 0.0
      %822 = vmatprep.subr.mxu0 0.0
      %823 = vmatpush1.msra.mxu0 0.0
      %824 = vmatprep.subr.mxu0 0.0
      %825 = vmatpush1.msra.mxu0 0.0
      %826 = vmatprep.subr.mxu0 0.0
      %827 = vmatpush1.msra.mxu0 0.0
      %828 = vmatprep.subr.mxu0 0.0
      %829 = vmatpush1.msra.mxu0 0.0
      %830 = vmatprep.subr.mxu0 %v800
      %831 = vmatpush1.msra.mxu0 %v798
      %832 = vmatprep.subr.mxu0 %v783
      %833 = vmatpush1.msra.mxu0 %v788
      %834 = vmatprep.subr.mxu0 0.0
      %835 = vmatpush2.msra.mxu0 0.0
      %836 = vmatprep.subr.mxu0 0.0
      %837 = vmatpush2.msra.mxu0 0.0
      %838 = vmatprep.subr.mxu0 0.0
      %839 = vmatpush2.msra.mxu0 0.0
      %840 = vmatprep.subr.mxu0 0.0
      %841 = vmatpush2.msra.mxu0 0.0
      %842 = vmatprep.subr.mxu0 0.0
      %843 = vmatpush2.msra.mxu0 0.0
      %844 = vmatprep.subr.mxu0 0.0
      %845 = vmatpush2.msra.mxu0 0.0
      %846 = vmatprep.subr.mxu0 0.0
      %847 = vmatpush2.msra.mxu0 0.0
      %848 = vmatprep.subr.mxu0 0.0
      %849 = vmatpush2.msra.mxu0 0.0
      %850 = vmatprep.subr.mxu0 0.0
      %851 = vmatpush2.msra.mxu0 0.0
      %852 = vmatprep.subr.mxu0 0.0
      %853 = vmatpush2.msra.mxu0 0.0
      %854 = vmatprep.subr.mxu0 0.0
      %855 = vmatpush2.msra.mxu0 0.0
      %856 = vmatprep.subr.mxu0 0.0
      %857 = vmatpush2.msra.mxu0 0.0
      %858 = vmatprep.subr.mxu0 0.0
      %859 = vmatpush2.msra.mxu0 0.0
      %860 = vmatprep.subr.mxu0 0.0
      %861 = vmatpush2.msra.mxu0 0.0
      %862 = vmatprep.subr.mxu0 0.0
      %863 = vmatpush2.msra.mxu0 0.0
      %864 = vmatprep.subr.mxu0 0.0
      %865 = vmatpush2.msra.mxu0 0.0
      %866 = vmatprep.mubr.f32.mxu0 0.0
      %867 = vmatmul.mubr.f32.gmra.mxu0 %v793
      %v868 = vpop.f32.mrf.mxu0
      %v869 = vadd.f32 0.0, %v868
      %v870 = vpop.f32.mrf.mxu0
      %v871 = vadd.f32 0.0, %v870
      %872 = vmatprep.mubr.f32.mxu0 0.0
      %873 = vmatmul.mubr.f32.gmra.mxu0 %v796
      %v874 = vpop.f32.mrf.mxu0
      %v875 = vadd.f32 0.0, %v874
      %v876 = vpop.f32.mrf.mxu0
      %v877 = vadd.f32 0.0, %v876
      %878 = vdwg.mxu0
      %v880 = vsel %vm333, %v767, 0
      %v883 = vsel %vm333, %v768, 0
      %v885 = vsel %vm340, %v771, 0
      %v887 = vsel %vm340, %v772, 0
      %889 = vmatprep.subr.mxu0 0.0
      %890 = vmatpush1.msra.mxu0 0.0
      %891 = vmatprep.subr.mxu0 0.0
      %892 = vmatpush1.msra.mxu0 0.0
      %893 = vmatprep.subr.mxu0 0.0
      %894 = vmatpush1.msra.mxu0 0.0
      %895 = vmatprep.subr.mxu0 0.0
      %896 = vmatpush1.msra.mxu0 0.0
      %897 = vmatprep.subr.mxu0 0.0
      %898 = vmatpush1.msra.mxu0 0.0
      %899 = vmatprep.subr.mxu0 0.0
      %900 = vmatpush1.msra.mxu0 0.0
      %901 = vmatprep.subr.mxu0 0.0
      %902 = vmatpush1.msra.mxu0 0.0
      %903 = vmatprep.subr.mxu0 0.0
      %904 = vmatpush1.msra.mxu0 0.0
      %905 = vmatprep.subr.mxu0 0.0
      %906 = vmatpush1.msra.mxu0 0.0
      %907 = vmatprep.subr.mxu0 0.0
      %908 = vmatpush1.msra.mxu0 0.0
      %909 = vmatprep.subr.mxu0 0.0
      %910 = vmatpush1.msra.mxu0 0.0
      %911 = vmatprep.subr.mxu0 0.0
      %912 = vmatpush1.msra.mxu0 0.0
      %913 = vmatprep.subr.mxu0 0.0
      %914 = vmatpush1.msra.mxu0 0.0
      %915 = vmatprep.subr.mxu0 0.0
      %916 = vmatpush1.msra.mxu0 0.0
      %917 = vmatprep.subr.mxu0 %v887
      %918 = vmatpush1.msra.mxu0 %v885
      %919 = vmatprep.subr.mxu0 %v770
      %920 = vmatpush1.msra.mxu0 %v769
      %921 = vmatprep.subr.mxu0 0.0
      %922 = vmatpush2.msra.mxu0 0.0
      %923 = vmatprep.subr.mxu0 0.0
      %924 = vmatpush2.msra.mxu0 0.0
      %925 = vmatprep.subr.mxu0 0.0
      %926 = vmatpush2.msra.mxu0 0.0
      %927 = vmatprep.subr.mxu0 0.0
      %928 = vmatpush2.msra.mxu0 0.0
      %929 = vmatprep.subr.mxu0 0.0
      %930 = vmatpush2.msra.mxu0 0.0
      %931 = vmatprep.subr.mxu0 0.0
      %932 = vmatpush2.msra.mxu0 0.0
      %933 = vmatprep.subr.mxu0 0.0
      %934 = vmatpush2.msra.mxu0 0.0
      %935 = vmatprep.subr.mxu0 0.0
      %936 = vmatpush2.msra.mxu0 0.0
      %937 = vmatprep.subr.mxu0 0.0
      %938 = vmatpush2.msra.mxu0 0.0
      %939 = vmatprep.subr.mxu0 0.0
      %940 = vmatpush2.msra.mxu0 0.0
      %941 = vmatprep.subr.mxu0 0.0
      %942 = vmatpush2.msra.mxu0 0.0
      %943 = vmatprep.subr.mxu0 0.0
      %944 = vmatpush2.msra.mxu0 0.0
      %945 = vmatprep.subr.mxu0 0.0
      %946 = vmatpush2.msra.mxu0 0.0
      %947 = vmatprep.subr.mxu0 0.0
      %948 = vmatpush2.msra.mxu0 0.0
      %949 = vmatprep.subr.mxu0 0.0
      %950 = vmatpush2.msra.mxu0 0.0
      %951 = vmatprep.subr.mxu0 0.0
      %952 = vmatpush2.msra.mxu0 0.0
      %953 = vmatprep.mubr.f32.mxu0 0.0
      %954 = vmatmul.mubr.f32.gmra.mxu0 %v880
      %v955 = vpop.f32.mrf.mxu0
      %v956 = vadd.f32 %v869, %v955
      %v957 = vpop.f32.mrf.mxu0
      %v958 = vadd.f32 %v871, %v957
      %959 = vmatprep.mubr.f32.mxu0 0.0
      %960 = vmatmul.mubr.f32.gmra.mxu0 %v883
      %v961 = vpop.f32.mrf.mxu0
      %v962 = vadd.f32 %v875, %v961
      %v963 = vpop.f32.mrf.mxu0
      %v964 = vadd.f32 %v877, %v963
      %965 = vdwg.mxu0
      %s966 = scalar_lea.vmem %s2, 96
      %v967 = vld [vmem:[%s966] sm:$0xff]
      %v968 = vld [vmem:[%s966 + $0x8] sm:$0xf]
      %969 = vrot.lane.b32.xlu0 %v769, 120
      %v970 = vpop.permute.xlu0 %969
      %971 = vrot.lane.b32.xlu0 %v770, 120
      %v972 = vpop.permute.xlu0 %971
      %973 = vrot.lane.b32.xlu0 %v771, 120
      %v974 = vpop.permute.xlu0 %973
      %975 = vrot.lane.b32.xlu0 %v772, 120
      %v976 = vpop.permute.xlu0 %975
      %v977 = vsel %vm520, %v970, %v972
      %v978 = vsel %vm520, %v974, %v976
      %v982 = vsel %vm333, %v967, 0
      %v985 = vsel %vm333, %v968, 0
      %v987 = vsel %vm340, %v978, 0
      %v989 = vsel %vm340, %v976, 0
      %991 = vmatprep.subr.mxu0 0.0
      %992 = vmatpush1.msra.mxu0 0.0
      %993 = vmatprep.subr.mxu0 0.0
      %994 = vmatpush1.msra.mxu0 0.0
      %995 = vmatprep.subr.mxu0 0.0
      %996 = vmatpush1.msra.mxu0 0.0
      %997 = vmatprep.subr.mxu0 0.0
      %998 = vmatpush1.msra.mxu0 0.0
      %999 = vmatprep.subr.mxu0 0.0
      %1000 = vmatpush1.msra.mxu0 0.0
      %1001 = vmatprep.subr.mxu0 0.0
      %1002 = vmatpush1.msra.mxu0 0.0
      %1003 = vmatprep.subr.mxu0 0.0
      %1004 = vmatpush1.msra.mxu0 0.0
      %1005 = vmatprep.subr.mxu0 0.0
      %1006 = vmatpush1.msra.mxu0 0.0
      %1007 = vmatprep.subr.mxu0 0.0
      %1008 = vmatpush1.msra.mxu0 0.0
      %1009 = vmatprep.subr.mxu0 0.0
      %1010 = vmatpush1.msra.mxu0 0.0
      %1011 = vmatprep.subr.mxu0 0.0
      %1012 = vmatpush1.msra.mxu0 0.0
      %1013 = vmatprep.subr.mxu0 0.0
      %1014 = vmatpush1.msra.mxu0 0.0
      %1015 = vmatprep.subr.mxu0 0.0
      %1016 = vmatpush1.msra.mxu0 0.0
      %1017 = vmatprep.subr.mxu0 0.0
      %1018 = vmatpush1.msra.mxu0 0.0
      %1019 = vmatprep.subr.mxu0 %v989
      %1020 = vmatpush1.msra.mxu0 %v987
      %1021 = vmatprep.subr.mxu0 %v972
      %1022 = vmatpush1.msra.mxu0 %v977
      %1023 = vmatprep.subr.mxu0 0.0
      %1024 = vmatpush2.msra.mxu0 0.0
      %1025 = vmatprep.subr.mxu0 0.0
      %1026 = vmatpush2.msra.mxu0 0.0
      %1027 = vmatprep.subr.mxu0 0.0
      %1028 = vmatpush2.msra.mxu0 0.0
      %1029 = vmatprep.subr.mxu0 0.0
      %1030 = vmatpush2.msra.mxu0 0.0
      %1031 = vmatprep.subr.mxu0 0.0
      %1032 = vmatpush2.msra.mxu0 0.0
      %1033 = vmatprep.subr.mxu0 0.0
      %1034 = vmatpush2.msra.mxu0 0.0
      %1035 = vmatprep.subr.mxu0 0.0
      %1036 = vmatpush2.msra.mxu0 0.0
      %1037 = vmatprep.subr.mxu0 0.0
      %1038 = vmatpush2.msra.mxu0 0.0
      %1039 = vmatprep.subr.mxu0 0.0
      %1040 = vmatpush2.msra.mxu0 0.0
      %1041 = vmatprep.subr.mxu0 0.0
      %1042 = vmatpush2.msra.mxu0 0.0
      %1043 = vmatprep.subr.mxu0 0.0
      %1044 = vmatpush2.msra.mxu0 0.0
      %1045 = vmatprep.subr.mxu0 0.0
      %1046 = vmatpush2.msra.mxu0 0.0
      %1047 = vmatprep.subr.mxu0 0.0
      %1048 = vmatpush2.msra.mxu0 0.0
      %1049 = vmatprep.subr.mxu0 0.0
      %1050 = vmatpush2.msra.mxu0 0.0
      %1051 = vmatprep.subr.mxu0 0.0
      %1052 = vmatpush2.msra.mxu0 0.0
      %1053 = vmatprep.subr.mxu0 0.0
      %1054 = vmatpush2.msra.mxu0 0.0
      %1055 = vmatprep.mubr.f32.mxu0 0.0
      %1056 = vmatmul.mubr.f32.gmra.mxu0 %v982
      %v1057 = vpop.f32.mrf.mxu0
      %v1058 = vadd.f32 0.0, %v1057
      %v1059 = vpop.f32.mrf.mxu0
      %v1060 = vadd.f32 0.0, %v1059
      %1061 = vmatprep.mubr.f32.mxu0 0.0
      %1062 = vmatmul.mubr.f32.gmra.mxu0 %v985
      %v1063 = vpop.f32.mrf.mxu0
      %v1064 = vadd.f32 0.0, %v1063
      %v1065 = vpop.f32.mrf.mxu0
      %v1066 = vadd.f32 0.0, %v1065
      %1067 = vdwg.mxu0
      %v1068 = vadd.f32 %v956, %v1058
      %v1069 = vadd.f32 %v958, %v1060
      %v1070 = vadd.f32 %v962, %v1064
      %v1071 = vadd.f32 %v964, %v1066
      %s1072 = scalar_lea.vmem %s2, 112
      %v1073 = vld [vmem:[%s1072] sm:$0xff]
      %v1074 = vld [vmem:[%s1072 + $0x8] sm:$0xf]
      %1075 = vrot.lane.b32.xlu0 %v769, 119
      %v1076 = vpop.permute.xlu0 %1075
      %1077 = vrot.lane.b32.xlu0 %v770, 119
      %v1078 = vpop.permute.xlu0 %1077
      %1079 = vrot.lane.b32.xlu0 %v771, 119
      %v1080 = vpop.permute.xlu0 %1079
      %1081 = vrot.lane.b32.xlu0 %v772, 119
      %v1082 = vpop.permute.xlu0 %1081
      %v1083 = vsel %vm627, %v1076, %v1078
      %v1084 = vsel %vm627, %v1080, %v1082
      %v1088 = vsel %vm333, %v1073, 0
      %v1091 = vsel %vm333, %v1074, 0
      %v1093 = vsel %vm340, %v1084, 0
      %v1095 = vsel %vm340, %v1082, 0
      %1097 = vmatprep.subr.mxu0 0.0
      %1098 = vmatpush1.msra.mxu0 0.0
      %1099 = vmatprep.subr.mxu0 0.0
      %1100 = vmatpush1.msra.mxu0 0.0
      %1101 = vmatprep.subr.mxu0 0.0
      %1102 = vmatpush1.msra.mxu0 0.0
      %1103 = vmatprep.subr.mxu0 0.0
      %1104 = vmatpush1.msra.mxu0 0.0
      %1105 = vmatprep.subr.mxu0 0.0
      %1106 = vmatpush1.msra.mxu0 0.0
      %1107 = vmatprep.subr.mxu0 0.0
      %1108 = vmatpush1.msra.mxu0 0.0
      %1109 = vmatprep.subr.mxu0 0.0
      %1110 = vmatpush1.msra.mxu0 0.0
      %1111 = vmatprep.subr.mxu0 0.0
      %1112 = vmatpush1.msra.mxu0 0.0
      %1113 = vmatprep.subr.mxu0 0.0
      %1114 = vmatpush1.msra.mxu0 0.0
      %1115 = vmatprep.subr.mxu0 0.0
      %1116 = vmatpush1.msra.mxu0 0.0
      %1117 = vmatprep.subr.mxu0 0.0
      %1118 = vmatpush1.msra.mxu0 0.0
      %1119 = vmatprep.subr.mxu0 0.0
      %1120 = vmatpush1.msra.mxu0 0.0
      %1121 = vmatprep.subr.mxu0 0.0
      %1122 = vmatpush1.msra.mxu0 0.0
      %1123 = vmatprep.subr.mxu0 0.0
      %1124 = vmatpush1.msra.mxu0 0.0
      %1125 = vmatprep.subr.mxu0 %v1095
      %1126 = vmatpush1.msra.mxu0 %v1093
      %1127 = vmatprep.subr.mxu0 %v1078
      %1128 = vmatpush1.msra.mxu0 %v1083
      %1129 = vmatprep.subr.mxu0 0.0
      %1130 = vmatpush2.msra.mxu0 0.0
      %1131 = vmatprep.subr.mxu0 0.0
      %1132 = vmatpush2.msra.mxu0 0.0
      %1133 = vmatprep.subr.mxu0 0.0
      %1134 = vmatpush2.msra.mxu0 0.0
      %1135 = vmatprep.subr.mxu0 0.0
      %1136 = vmatpush2.msra.mxu0 0.0
      %1137 = vmatprep.subr.mxu0 0.0
      %1138 = vmatpush2.msra.mxu0 0.0
      %1139 = vmatprep.subr.mxu0 0.0
      %1140 = vmatpush2.msra.mxu0 0.0
      %1141 = vmatprep.subr.mxu0 0.0
      %1142 = vmatpush2.msra.mxu0 0.0
      %1143 = vmatprep.subr.mxu0 0.0
      %1144 = vmatpush2.msra.mxu0 0.0
      %1145 = vmatprep.subr.mxu0 0.0
      %1146 = vmatpush2.msra.mxu0 0.0
      %1147 = vmatprep.subr.mxu0 0.0
      %1148 = vmatpush2.msra.mxu0 0.0
      %1149 = vmatprep.subr.mxu0 0.0
      %1150 = vmatpush2.msra.mxu0 0.0
      %1151 = vmatprep.subr.mxu0 0.0
      %1152 = vmatpush2.msra.mxu0 0.0
      %1153 = vmatprep.subr.mxu0 0.0
      %1154 = vmatpush2.msra.mxu0 0.0
      %1155 = vmatprep.subr.mxu0 0.0
      %1156 = vmatpush2.msra.mxu0 0.0
      %1157 = vmatprep.subr.mxu0 0.0
      %1158 = vmatpush2.msra.mxu0 0.0
      %1159 = vmatprep.subr.mxu0 0.0
      %1160 = vmatpush2.msra.mxu0 0.0
      %1161 = vmatprep.mubr.f32.mxu0 0.0
      %1162 = vmatmul.mubr.f32.gmra.mxu0 %v1088
      %v1163 = vpop.f32.mrf.mxu0
      %v1164 = vadd.f32 0.0, %v1163
      %v1165 = vpop.f32.mrf.mxu0
      %v1166 = vadd.f32 0.0, %v1165
      %1167 = vmatprep.mubr.f32.mxu0 0.0
      %1168 = vmatmul.mubr.f32.gmra.mxu0 %v1091
      %v1169 = vpop.f32.mrf.mxu0
      %v1170 = vadd.f32 0.0, %v1169
      %v1171 = vpop.f32.mrf.mxu0
      %v1172 = vadd.f32 0.0, %v1171
      %1173 = vdwg.mxu0
      %v1174 = vadd.f32 %v1068, %v1164
      %v1175 = vadd.f32 %v1069, %v1166
      %v1176 = vadd.f32 %v1070, %v1170
      %v1177 = vadd.f32 %v1071, %v1172
      %s1178 = scalar_lea.vmem %s3, 16
      %v1179 = vld [vmem:[%s1178] sm:$0xff]
      %v1180 = vld [vmem:[%s1178 + $0x8] sm:$0xf]
      %1182 = vset.pattern.permute.xlu0 0
      %1183 = vperm.xlu0 %1182, %v1179
      %v1184 = vpop.permute.xlu0 %1183
      %1187 = vset.pattern.permute.xlu0 0
      %1188 = vperm.xlu0 %1187, %v1180
      %v1189 = vpop.permute.xlu0 %1188
      %v1191 = vadd.f32 %v1174, %v1184
      %v1192 = vadd.f32 %v1175, %v1184
      %v1193 = vadd.f32 %v1176, %v1189
      %v1194 = vadd.f32 %v1177, %v1189
      %v1195 = vmax.f32 %v1191, 0.0
      %v1196 = vmax.f32 %v1192, 0.0
      %v1197 = vmax.f32 %v1193, 0.0
      %v1198 = vmax.f32 %v1194, 0.0
      %v1200 = vlaneseq
      %v1201 = vshrl.u32 %v1200, 7
      %v1202 = vsub.s32 0, %v1201
      %v1203 = vrot.slane %v765, %v1202
      %v1204 = vlaneseq
      %v1205 = vshrl.u32 %v1204, 7
      %v1206 = vsub.s32 1, %v1205
      %v1207 = vrot.slane %v765, %v1206
      %v1210 = vmul.f32 %v1195, %v1203
      %v1211 = vmul.f32 %v1196, %v1207
      %v1212 = vmul.f32 %v1197, %v1203
      %v1213 = vmul.f32 %v1198, %v1207
      %1214 = vst [vmem:[#allocation3] sm:$0xff] %v1210
      %vm1215 = vcmask 130048
      %1216 = vst.msk [vmem:[#allocation3 + $0x8] sm:$0xff] %vm1215, %v1211
      %1217 = vst [vmem:[#allocation3 + $0x10] sm:$0xf] %v1212
      %vm1218 = vcmask 125952
      %1219 = vst.msk [vmem:[#allocation3 + $0x18] sm:$0xf] %vm1218, %v1213
      %v1220 = vld [vmem:[%s1 + $0x2] sm:$0x1]
      %s1221 = scalar_lea.vmem %s2, 128
      %v1222 = vld [vmem:[%s1221] sm:$0xff]
      %v1223 = vld [vmem:[%s1221 + $0x8] sm:$0xf]
      %v1224 = vld [vmem:[#allocation3] sm:$0xff]
      %v1225 = vld [vmem:[#allocation3 + $0x10] sm:$0xf]
      %s1226 = scalar_lea.vmem %s2, 144
      %v1227 = vld [vmem:[%s1226] sm:$0xff]
      %v1228 = vld [vmem:[%s1226 + $0x8] sm:$0xf]
      %v1229 = vld [vmem:[#allocation3 + $0x8] sm:$0xff]
      %v1230 = vld [vmem:[#allocation3 + $0x18] sm:$0xf]
      %1235 = vrot.lane.b32.xlu0 %v1224, 127
      %v1236 = vpop.permute.xlu0 %1235
      %1237 = vrot.lane.b32.xlu0 %v1229, 127
      %v1238 = vpop.permute.xlu0 %1237
      %1239 = vrot.lane.b32.xlu0 %v1225, 127
      %v1240 = vpop.permute.xlu0 %1239
      %1241 = vrot.lane.b32.xlu0 %v1230, 127
      %v1242 = vpop.permute.xlu0 %1241
      %v1243 = vsel %vm328, %v1236, %v1238
      %v1244 = vsel %vm328, %v1240, %v1242
      %v1247 = vsel %vm333, %v1227, 0
      %v1250 = vsel %vm333, %v1228, 0
      %v1252 = vsel %vm340, %v1244, 0
      %1254 = vmatprep.subr.mxu0 0.0
      %1255 = vmatpush1.msra.mxu0 0.0
      %1256 = vmatprep.subr.mxu0 0.0
      %1257 = vmatpush1.msra.mxu0 0.0
      %1258 = vmatprep.subr.mxu0 0.0
      %1259 = vmatpush1.msra.mxu0 0.0
      %1260 = vmatprep.subr.mxu0 0.0
      %1261 = vmatpush1.msra.mxu0 0.0
      %1262 = vmatprep.subr.mxu0 0.0
      %1263 = vmatpush1.msra.mxu0 0.0
      %1264 = vmatprep.subr.mxu0 0.0
      %1265 = vmatpush1.msra.mxu0 0.0
      %1266 = vmatprep.subr.mxu0 0.0
      %1267 = vmatpush1.msra.mxu0 0.0
      %1268 = vmatprep.subr.mxu0 0.0
      %1269 = vmatpush1.msra.mxu0 0.0
      %1270 = vmatprep.subr.mxu0 0.0
      %1271 = vmatpush1.msra.mxu0 0.0
      %1272 = vmatprep.subr.mxu0 0.0
      %1273 = vmatpush1.msra.mxu0 0.0
      %1274 = vmatprep.subr.mxu0 0.0
      %1275 = vmatpush1.msra.mxu0 0.0
      %1276 = vmatprep.subr.mxu0 0.0
      %1277 = vmatpush1.msra.mxu0 0.0
      %1278 = vmatprep.subr.mxu0 0.0
      %1279 = vmatpush1.msra.mxu0 0.0
      %1280 = vmatprep.subr.mxu0 0.0
      %1281 = vmatpush1.msra.mxu0 0.0
      %1282 = vmatprep.subr.mxu0 0.0
      %1283 = vmatpush1.msra.mxu0 %v1252
      %1284 = vmatprep.subr.mxu0 0.0
      %1285 = vmatpush1.msra.mxu0 %v1243
      %1286 = vmatprep.subr.mxu0 0.0
      %1287 = vmatpush2.msra.mxu0 0.0
      %1288 = vmatprep.subr.mxu0 0.0
      %1289 = vmatpush2.msra.mxu0 0.0
      %1290 = vmatprep.subr.mxu0 0.0
      %1291 = vmatpush2.msra.mxu0 0.0
      %1292 = vmatprep.subr.mxu0 0.0
      %1293 = vmatpush2.msra.mxu0 0.0
      %1294 = vmatprep.subr.mxu0 0.0
      %1295 = vmatpush2.msra.mxu0 0.0
      %1296 = vmatprep.subr.mxu0 0.0
      %1297 = vmatpush2.msra.mxu0 0.0
      %1298 = vmatprep.subr.mxu0 0.0
      %1299 = vmatpush2.msra.mxu0 0.0
      %1300 = vmatprep.subr.mxu0 0.0
      %1301 = vmatpush2.msra.mxu0 0.0
      %1302 = vmatprep.subr.mxu0 0.0
      %1303 = vmatpush2.msra.mxu0 0.0
      %1304 = vmatprep.subr.mxu0 0.0
      %1305 = vmatpush2.msra.mxu0 0.0
      %1306 = vmatprep.subr.mxu0 0.0
      %1307 = vmatpush2.msra.mxu0 0.0
      %1308 = vmatprep.subr.mxu0 0.0
      %1309 = vmatpush2.msra.mxu0 0.0
      %1310 = vmatprep.subr.mxu0 0.0
      %1311 = vmatpush2.msra.mxu0 0.0
      %1312 = vmatprep.subr.mxu0 0.0
      %1313 = vmatpush2.msra.mxu0 0.0
      %1314 = vmatprep.subr.mxu0 0.0
      %1315 = vmatpush2.msra.mxu0 0.0
      %1316 = vmatprep.subr.mxu0 0.0
      %1317 = vmatpush2.msra.mxu0 0.0
      %1318 = vmatprep.mubr.f32.mxu0 0.0
      %1319 = vmatmul.mubr.f32.gmra.mxu0 %v1247
      %v1320 = vpop.f32.mrf.mxu0
      %v1321 = vadd.f32 0.0, %v1320
      %v1322 = vpop.f32.mrf.mxu0
      %1323 = vmatprep.mubr.f32.mxu0 0.0
      %1324 = vmatmul.mubr.f32.gmra.mxu0 %v1250
      %v1325 = vpop.f32.mrf.mxu0
      %v1326 = vadd.f32 0.0, %v1325
      %v1327 = vpop.f32.mrf.mxu0
      %1328 = vdwg.mxu0
      %v1330 = vsel %vm333, %v1222, 0
      %v1333 = vsel %vm333, %v1223, 0
      %v1335 = vsel %vm340, %v1225, 0
      %1337 = vmatprep.subr.mxu0 0.0
      %1338 = vmatpush1.msra.mxu0 0.0
      %1339 = vmatprep.subr.mxu0 0.0
      %1340 = vmatpush1.msra.mxu0 0.0
      %1341 = vmatprep.subr.mxu0 0.0
      %1342 = vmatpush1.msra.mxu0 0.0
      %1343 = vmatprep.subr.mxu0 0.0
      %1344 = vmatpush1.msra.mxu0 0.0
      %1345 = vmatprep.subr.mxu0 0.0
      %1346 = vmatpush1.msra.mxu0 0.0
      %1347 = vmatprep.subr.mxu0 0.0
      %1348 = vmatpush1.msra.mxu0 0.0
      %1349 = vmatprep.subr.mxu0 0.0
      %1350 = vmatpush1.msra.mxu0 0.0
      %1351 = vmatprep.subr.mxu0 0.0
      %1352 = vmatpush1.msra.mxu0 0.0
      %1353 = vmatprep.subr.mxu0 0.0
      %1354 = vmatpush1.msra.mxu0 0.0
      %1355 = vmatprep.subr.mxu0 0.0
      %1356 = vmatpush1.msra.mxu0 0.0
      %1357 = vmatprep.subr.mxu0 0.0
      %1358 = vmatpush1.msra.mxu0 0.0
      %1359 = vmatprep.subr.mxu0 0.0
      %1360 = vmatpush1.msra.mxu0 0.0
      %1361 = vmatprep.subr.mxu0 0.0
      %1362 = vmatpush1.msra.mxu0 0.0
      %1363 = vmatprep.subr.mxu0 0.0
      %1364 = vmatpush1.msra.mxu0 0.0
      %1365 = vmatprep.subr.mxu0 0.0
      %1366 = vmatpush1.msra.mxu0 %v1335
      %1367 = vmatprep.subr.mxu0 0.0
      %1368 = vmatpush1.msra.mxu0 %v1224
      %1369 = vmatprep.subr.mxu0 0.0
      %1370 = vmatpush2.msra.mxu0 0.0
      %1371 = vmatprep.subr.mxu0 0.0
      %1372 = vmatpush2.msra.mxu0 0.0
      %1373 = vmatprep.subr.mxu0 0.0
      %1374 = vmatpush2.msra.mxu0 0.0
      %1375 = vmatprep.subr.mxu0 0.0
      %1376 = vmatpush2.msra.mxu0 0.0
      %1377 = vmatprep.subr.mxu0 0.0
      %1378 = vmatpush2.msra.mxu0 0.0
      %1379 = vmatprep.subr.mxu0 0.0
      %1380 = vmatpush2.msra.mxu0 0.0
      %1381 = vmatprep.subr.mxu0 0.0
      %1382 = vmatpush2.msra.mxu0 0.0
      %1383 = vmatprep.subr.mxu0 0.0
      %1384 = vmatpush2.msra.mxu0 0.0
      %1385 = vmatprep.subr.mxu0 0.0
      %1386 = vmatpush2.msra.mxu0 0.0
      %1387 = vmatprep.subr.mxu0 0.0
      %1388 = vmatpush2.msra.mxu0 0.0
      %1389 = vmatprep.subr.mxu0 0.0
      %1390 = vmatpush2.msra.mxu0 0.0
      %1391 = vmatprep.subr.mxu0 0.0
      %1392 = vmatpush2.msra.mxu0 0.0
      %1393 = vmatprep.subr.mxu0 0.0
      %1394 = vmatpush2.msra.mxu0 0.0
      %1395 = vmatprep.subr.mxu0 0.0
      %1396 = vmatpush2.msra.mxu0 0.0
      %1397 = vmatprep.subr.mxu0 0.0
      %1398 = vmatpush2.msra.mxu0 0.0
      %1399 = vmatprep.subr.mxu0 0.0
      %1400 = vmatpush2.msra.mxu0 0.0
      %1401 = vmatprep.mubr.f32.mxu0 0.0
      %1402 = vmatmul.mubr.f32.gmra.mxu0 %v1330
      %v1403 = vpop.f32.mrf.mxu0
      %v1404 = vadd.f32 %v1321, %v1403
      %v1405 = vpop.f32.mrf.mxu0
      %1406 = vmatprep.mubr.f32.mxu0 0.0
      %1407 = vmatmul.mubr.f32.gmra.mxu0 %v1333
      %v1408 = vpop.f32.mrf.mxu0
      %v1409 = vadd.f32 %v1326, %v1408
      %v1410 = vpop.f32.mrf.mxu0
      %1411 = vdwg.mxu0
      %s1412 = scalar_lea.vmem %s2, 160
      %v1413 = vld [vmem:[%s1412] sm:$0xff]
      %v1414 = vld [vmem:[%s1412 + $0x8] sm:$0xf]
      %1415 = vrot.lane.b32.xlu0 %v1224, 120
      %v1416 = vpop.permute.xlu0 %1415
      %1417 = vrot.lane.b32.xlu0 %v1229, 120
      %v1418 = vpop.permute.xlu0 %1417
      %1419 = vrot.lane.b32.xlu0 %v1225, 120
      %v1420 = vpop.permute.xlu0 %1419
      %1421 = vrot.lane.b32.xlu0 %v1230, 120
      %v1422 = vpop.permute.xlu0 %1421
      %v1423 = vsel %vm520, %v1416, %v1418
      %v1424 = vsel %vm520, %v1420, %v1422
      %v1427 = vsel %vm333, %v1413, 0
      %v1430 = vsel %vm333, %v1414, 0
      %v1432 = vsel %vm340, %v1424, 0
      %1434 = vmatprep.subr.mxu0 0.0
      %1435 = vmatpush1.msra.mxu0 0.0
      %1436 = vmatprep.subr.mxu0 0.0
      %1437 = vmatpush1.msra.mxu0 0.0
      %1438 = vmatprep.subr.mxu0 0.0
      %1439 = vmatpush1.msra.mxu0 0.0
      %1440 = vmatprep.subr.mxu0 0.0
      %1441 = vmatpush1.msra.mxu0 0.0
      %1442 = vmatprep.subr.mxu0 0.0
      %1443 = vmatpush1.msra.mxu0 0.0
      %1444 = vmatprep.subr.mxu0 0.0
      %1445 = vmatpush1.msra.mxu0 0.0
      %1446 = vmatprep.subr.mxu0 0.0
      %1447 = vmatpush1.msra.mxu0 0.0
      %1448 = vmatprep.subr.mxu0 0.0
      %1449 = vmatpush1.msra.mxu0 0.0
      %1450 = vmatprep.subr.mxu0 0.0
      %1451 = vmatpush1.msra.mxu0 0.0
      %1452 = vmatprep.subr.mxu0 0.0
      %1453 = vmatpush1.msra.mxu0 0.0
      %1454 = vmatprep.subr.mxu0 0.0
      %1455 = vmatpush1.msra.mxu0 0.0
      %1456 = vmatprep.subr.mxu0 0.0
      %1457 = vmatpush1.msra.mxu0 0.0
      %1458 = vmatprep.subr.mxu0 0.0
      %1459 = vmatpush1.msra.mxu0 0.0
      %1460 = vmatprep.subr.mxu0 0.0
      %1461 = vmatpush1.msra.mxu0 0.0
      %1462 = vmatprep.subr.mxu0 0.0
      %1463 = vmatpush1.msra.mxu0 %v1432
      %1464 = vmatprep.subr.mxu0 0.0
      %1465 = vmatpush1.msra.mxu0 %v1423
      %1466 = vmatprep.subr.mxu0 0.0
      %1467 = vmatpush2.msra.mxu0 0.0
      %1468 = vmatprep.subr.mxu0 0.0
      %1469 = vmatpush2.msra.mxu0 0.0
      %1470 = vmatprep.subr.mxu0 0.0
      %1471 = vmatpush2.msra.mxu0 0.0
      %1472 = vmatprep.subr.mxu0 0.0
      %1473 = vmatpush2.msra.mxu0 0.0
      %1474 = vmatprep.subr.mxu0 0.0
      %1475 = vmatpush2.msra.mxu0 0.0
      %1476 = vmatprep.subr.mxu0 0.0
      %1477 = vmatpush2.msra.mxu0 0.0
      %1478 = vmatprep.subr.mxu0 0.0
      %1479 = vmatpush2.msra.mxu0 0.0
      %1480 = vmatprep.subr.mxu0 0.0
      %1481 = vmatpush2.msra.mxu0 0.0
      %1482 = vmatprep.subr.mxu0 0.0
      %1483 = vmatpush2.msra.mxu0 0.0
      %1484 = vmatprep.subr.mxu0 0.0
      %1485 = vmatpush2.msra.mxu0 0.0
      %1486 = vmatprep.subr.mxu0 0.0
      %1487 = vmatpush2.msra.mxu0 0.0
      %1488 = vmatprep.subr.mxu0 0.0
      %1489 = vmatpush2.msra.mxu0 0.0
      %1490 = vmatprep.subr.mxu0 0.0
      %1491 = vmatpush2.msra.mxu0 0.0
      %1492 = vmatprep.subr.mxu0 0.0
      %1493 = vmatpush2.msra.mxu0 0.0
      %1494 = vmatprep.subr.mxu0 0.0
      %1495 = vmatpush2.msra.mxu0 0.0
      %1496 = vmatprep.subr.mxu0 0.0
      %1497 = vmatpush2.msra.mxu0 0.0
      %1498 = vmatprep.mubr.f32.mxu0 0.0
      %1499 = vmatmul.mubr.f32.gmra.mxu0 %v1427
      %v1500 = vpop.f32.mrf.mxu0
      %v1501 = vadd.f32 0.0, %v1500
      %v1502 = vpop.f32.mrf.mxu0
      %1503 = vmatprep.mubr.f32.mxu0 0.0
      %1504 = vmatmul.mubr.f32.gmra.mxu0 %v1430
      %v1505 = vpop.f32.mrf.mxu0
      %v1506 = vadd.f32 0.0, %v1505
      %v1507 = vpop.f32.mrf.mxu0
      %1508 = vdwg.mxu0
      %v1509 = vadd.f32 %v1404, %v1501
      %v1510 = vadd.f32 %v1409, %v1506
      %s1511 = scalar_lea.vmem %s2, 176
      %v1512 = vld [vmem:[%s1511] sm:$0xff]
      %v1513 = vld [vmem:[%s1511 + $0x8] sm:$0xf]
      %1514 = vrot.lane.b32.xlu0 %v1224, 119
      %v1515 = vpop.permute.xlu0 %1514
      %1516 = vrot.lane.b32.xlu0 %v1229, 119
      %v1517 = vpop.permute.xlu0 %1516
      %1518 = vrot.lane.b32.xlu0 %v1225, 119
      %v1519 = vpop.permute.xlu0 %1518
      %1520 = vrot.lane.b32.xlu0 %v1230, 119
      %v1521 = vpop.permute.xlu0 %1520
      %v1522 = vsel %vm627, %v1515, %v1517
      %v1523 = vsel %vm627, %v1519, %v1521
      %v1526 = vsel %vm333, %v1512, 0
      %v1529 = vsel %vm333, %v1513, 0
      %v1531 = vsel %vm340, %v1523, 0
      %1533 = vmatprep.subr.mxu0 0.0
      %1534 = vmatpush1.msra.mxu0 0.0
      %1535 = vmatprep.subr.mxu0 0.0
      %1536 = vmatpush1.msra.mxu0 0.0
      %1537 = vmatprep.subr.mxu0 0.0
      %1538 = vmatpush1.msra.mxu0 0.0
      %1539 = vmatprep.subr.mxu0 0.0
      %1540 = vmatpush1.msra.mxu0 0.0
      %1541 = vmatprep.subr.mxu0 0.0
      %1542 = vmatpush1.msra.mxu0 0.0
      %1543 = vmatprep.subr.mxu0 0.0
      %1544 = vmatpush1.msra.mxu0 0.0
      %1545 = vmatprep.subr.mxu0 0.0
      %1546 = vmatpush1.msra.mxu0 0.0
      %1547 = vmatprep.subr.mxu0 0.0
      %1548 = vmatpush1.msra.mxu0 0.0
      %1549 = vmatprep.subr.mxu0 0.0
      %1550 = vmatpush1.msra.mxu0 0.0
      %1551 = vmatprep.subr.mxu0 0.0
      %1552 = vmatpush1.msra.mxu0 0.0
      %1553 = vmatprep.subr.mxu0 0.0
      %1554 = vmatpush1.msra.mxu0 0.0
      %1555 = vmatprep.subr.mxu0 0.0
      %1556 = vmatpush1.msra.mxu0 0.0
      %1557 = vmatprep.subr.mxu0 0.0
      %1558 = vmatpush1.msra.mxu0 0.0
      %1559 = vmatprep.subr.mxu0 0.0
      %1560 = vmatpush1.msra.mxu0 0.0
      %1561 = vmatprep.subr.mxu0 0.0
      %1562 = vmatpush1.msra.mxu0 %v1531
      %1563 = vmatprep.subr.mxu0 0.0
      %1564 = vmatpush1.msra.mxu0 %v1522
      %1565 = vmatprep.subr.mxu0 0.0
      %1566 = vmatpush2.msra.mxu0 0.0
      %1567 = vmatprep.subr.mxu0 0.0
      %1568 = vmatpush2.msra.mxu0 0.0
      %1569 = vmatprep.subr.mxu0 0.0
      %1570 = vmatpush2.msra.mxu0 0.0
      %1571 = vmatprep.subr.mxu0 0.0
      %1572 = vmatpush2.msra.mxu0 0.0
      %1573 = vmatprep.subr.mxu0 0.0
      %1574 = vmatpush2.msra.mxu0 0.0
      %1575 = vmatprep.subr.mxu0 0.0
      %1576 = vmatpush2.msra.mxu0 0.0
      %1577 = vmatprep.subr.mxu0 0.0
      %1578 = vmatpush2.msra.mxu0 0.0
      %1579 = vmatprep.subr.mxu0 0.0
      %1580 = vmatpush2.msra.mxu0 0.0
      %1581 = vmatprep.subr.mxu0 0.0
      %1582 = vmatpush2.msra.mxu0 0.0
      %1583 = vmatprep.subr.mxu0 0.0
      %1584 = vmatpush2.msra.mxu0 0.0
      %1585 = vmatprep.subr.mxu0 0.0
      %1586 = vmatpush2.msra.mxu0 0.0
      %1587 = vmatprep.subr.mxu0 0.0
      %1588 = vmatpush2.msra.mxu0 0.0
      %1589 = vmatprep.subr.mxu0 0.0
      %1590 = vmatpush2.msra.mxu0 0.0
      %1591 = vmatprep.subr.mxu0 0.0
      %1592 = vmatpush2.msra.mxu0 0.0
      %1593 = vmatprep.subr.mxu0 0.0
      %1594 = vmatpush2.msra.mxu0 0.0
      %1595 = vmatprep.subr.mxu0 0.0
      %1596 = vmatpush2.msra.mxu0 0.0
      %1597 = vmatprep.mubr.f32.mxu0 0.0
      %1598 = vmatmul.mubr.f32.gmra.mxu0 %v1526
      %v1599 = vpop.f32.mrf.mxu0
      %v1600 = vadd.f32 0.0, %v1599
      %v1601 = vpop.f32.mrf.mxu0
      %1602 = vmatprep.mubr.f32.mxu0 0.0
      %1603 = vmatmul.mubr.f32.gmra.mxu0 %v1529
      %v1604 = vpop.f32.mrf.mxu0
      %v1605 = vadd.f32 0.0, %v1604
      %v1606 = vpop.f32.mrf.mxu0
      %1607 = vdwg.mxu0
      %v1608 = vadd.f32 %v1509, %v1600
      %v1609 = vadd.f32 %v1510, %v1605
      %s1610 = scalar_lea.vmem %s3, 32
      %v1611 = vld [vmem:[%s1610] sm:$0xff]
      %v1612 = vld [vmem:[%s1610 + $0x8] sm:$0xf]
      %1614 = vset.pattern.permute.xlu0 0
      %1615 = vperm.xlu0 %1614, %v1611
      %v1616 = vpop.permute.xlu0 %1615
      %1619 = vset.pattern.permute.xlu0 0
      %1620 = vperm.xlu0 %1619, %v1612
      %v1621 = vpop.permute.xlu0 %1620
      %v1623 = vadd.f32 %v1608, %v1616
      %v1624 = vadd.f32 %v1609, %v1621
      %v1625 = vmax.f32 %v1623, 0.0
      %v1626 = vmax.f32 %v1624, 0.0
      %v1627 = vlaneseq
      %v1628 = vshrl.u32 %v1627, 7
      %v1629 = vsub.s32 0, %v1628
      %v1630 = vrot.slane %v1220, %v1629
      %v1631 = vmul.f32 %v1625, %v1630
      %v1632 = vmul.f32 %v1626, %v1630
      %v1633 = vld [vmem:[%s4] sm:$0xff]
      %v1634 = vld [vmem:[%s4 + $0x8] sm:$0xff]
      %v1635 = vld [vmem:[%s4 + $0x10] sm:$0xff]
      %v1636 = vld [vmem:[%s5] sm:$0xff]
      %v1637 = vld [vmem:[%s5 + $0x8] sm:$0xff]
      %v1638 = vld [vmem:[%s5 + $0x10] sm:$0xff]
      %1640 = vset.pattern.permute.xlu0 0
      %1641 = vperm.xlu0 %1640, %v1636
      %v1642 = vpop.permute.xlu0 %1641
      %1645 = vset.pattern.permute.xlu0 0
      %1646 = vperm.xlu0 %1645, %v1637
      %v1647 = vpop.permute.xlu0 %1646
      %1650 = vset.pattern.permute.xlu0 0
      %1651 = vperm.xlu0 %1650, %v1638
      %v1652 = vpop.permute.xlu0 %1651
      %v1655 = vsel %vm333, %v1633, 0
      %v1658 = vsel %vm333, %v1634, 0
      %v1661 = vsel %vm333, %v1635, 0
      %v1664 = vsel %vm340, %v1632, 0
      %1666 = vmatprep.subr.mxu0 0.0
      %1667 = vmatpush1.msra.mxu0 0.0
      %1668 = vmatprep.subr.mxu0 0.0
      %1669 = vmatpush1.msra.mxu0 0.0
      %1670 = vmatprep.subr.mxu0 0.0
      %1671 = vmatpush1.msra.mxu0 0.0
      %1672 = vmatprep.subr.mxu0 0.0
      %1673 = vmatpush1.msra.mxu0 0.0
      %1674 = vmatprep.subr.mxu0 0.0
      %1675 = vmatpush1.msra.mxu0 0.0
      %1676 = vmatprep.subr.mxu0 0.0
      %1677 = vmatpush1.msra.mxu0 0.0
      %1678 = vmatprep.subr.mxu0 0.0
      %1679 = vmatpush1.msra.mxu0 0.0
      %1680 = vmatprep.subr.mxu0 0.0
      %1681 = vmatpush1.msra.mxu0 0.0
      %1682 = vmatprep.subr.mxu0 0.0
      %1683 = vmatpush1.msra.mxu0 0.0
      %1684 = vmatprep.subr.mxu0 0.0
      %1685 = vmatpush1.msra.mxu0 0.0
      %1686 = vmatprep.subr.mxu0 0.0
      %1687 = vmatpush1.msra.mxu0 0.0
      %1688 = vmatprep.subr.mxu0 0.0
      %1689 = vmatpush1.msra.mxu0 0.0
      %1690 = vmatprep.subr.mxu0 0.0
      %1691 = vmatpush1.msra.mxu0 0.0
      %1692 = vmatprep.subr.mxu0 0.0
      %1693 = vmatpush1.msra.mxu0 0.0
      %1694 = vmatprep.subr.mxu0 0.0
      %1695 = vmatpush1.msra.mxu0 %v1664
      %1696 = vmatprep.subr.mxu0 0.0
      %1697 = vmatpush1.msra.mxu0 %v1631
      %1698 = vmatprep.subr.mxu0 0.0
      %1699 = vmatpush2.msra.mxu0 0.0
      %1700 = vmatprep.subr.mxu0 0.0
      %1701 = vmatpush2.msra.mxu0 0.0
      %1702 = vmatprep.subr.mxu0 0.0
      %1703 = vmatpush2.msra.mxu0 0.0
      %1704 = vmatprep.subr.mxu0 0.0
      %1705 = vmatpush2.msra.mxu0 0.0
      %1706 = vmatprep.subr.mxu0 0.0
      %1707 = vmatpush2.msra.mxu0 0.0
      %1708 = vmatprep.subr.mxu0 0.0
      %1709 = vmatpush2.msra.mxu0 0.0
      %1710 = vmatprep.subr.mxu0 0.0
      %1711 = vmatpush2.msra.mxu0 0.0
      %1712 = vmatprep.subr.mxu0 0.0
      %1713 = vmatpush2.msra.mxu0 0.0
      %1714 = vmatprep.subr.mxu0 0.0
      %1715 = vmatpush2.msra.mxu0 0.0
      %1716 = vmatprep.subr.mxu0 0.0
      %1717 = vmatpush2.msra.mxu0 0.0
      %1718 = vmatprep.subr.mxu0 0.0
      %1719 = vmatpush2.msra.mxu0 0.0
      %1720 = vmatprep.subr.mxu0 0.0
      %1721 = vmatpush2.msra.mxu0 0.0
      %1722 = vmatprep.subr.mxu0 0.0
      %1723 = vmatpush2.msra.mxu0 0.0
      %1724 = vmatprep.subr.mxu0 0.0
      %1725 = vmatpush2.msra.mxu0 0.0
      %1726 = vmatprep.subr.mxu0 0.0
      %1727 = vmatpush2.msra.mxu0 0.0
      %1728 = vmatprep.subr.mxu0 0.0
      %1729 = vmatpush2.msra.mxu0 0.0
      %1730 = vmatprep.mubr.f32.mxu0 0.0
      %1731 = vmatmul.mubr.f32.gmra.mxu0 %v1655
      %v1732 = vpop.f32.mrf.mxu0
      %v1733 = vadd.f32 %v1642, %v1732
      %v1734 = vpop.f32.mrf.mxu0
      %1735 = vmatprep.mubr.f32.mxu0 0.0
      %1736 = vmatmul.mubr.f32.gmra.mxu0 %v1658
      %v1737 = vpop.f32.mrf.mxu0
      %v1738 = vadd.f32 %v1647, %v1737
      %v1739 = vpop.f32.mrf.mxu0
      %1740 = vmatprep.mubr.f32.mxu0 0.0
      %1741 = vmatmul.mubr.f32.gmra.mxu0 %v1661
      %v1742 = vpop.f32.mrf.mxu0
      %v1743 = vadd.f32 %v1652, %v1742
      %v1744 = vpop.f32.mrf.mxu0
      %1745 = vdwg.mxu0
      %v1746 = vmax.f32 %v1733, 0.0
      %v1747 = vmax.f32 %v1738, 0.0
      %v1748 = vmax.f32 %v1743, 0.0
      %v1749 = vld [vmem:[%s6] sm:$0xff]
      %v1750 = vld [vmem:[%s6 + $0x8] sm:$0xff]
      %v1751 = vld [vmem:[%s7] sm:$0xff]
      %v1752 = vld [vmem:[%s7 + $0x8] sm:$0xff]
      %1754 = vset.pattern.permute.xlu0 0
      %1755 = vperm.xlu0 %1754, %v1751
      %v1756 = vpop.permute.xlu0 %1755
      %1759 = vset.pattern.permute.xlu0 0
      %1760 = vperm.xlu0 %1759, %v1752
      %v1761 = vpop.permute.xlu0 %1760
      %vm1763 = vcmask 195584
      %v1765 = vsel %vm1763, %v1749, 0
      %v1768 = vsel %vm1763, %v1750, 0
      %1770 = vmatprep.subr.mxu0 0.0
      %1771 = vmatpush1.msra.mxu0 0.0
      %1772 = vmatprep.subr.mxu0 0.0
      %1773 = vmatpush1.msra.mxu0 0.0
      %1774 = vmatprep.subr.mxu0 0.0
      %1775 = vmatpush1.msra.mxu0 0.0
      %1776 = vmatprep.subr.mxu0 0.0
      %1777 = vmatpush1.msra.mxu0 0.0
      %1778 = vmatprep.subr.mxu0 0.0
      %1779 = vmatpush1.msra.mxu0 0.0
      %1780 = vmatprep.subr.mxu0 0.0
      %1781 = vmatpush1.msra.mxu0 0.0
      %1782 = vmatprep.subr.mxu0 0.0
      %1783 = vmatpush1.msra.mxu0 0.0
      %1784 = vmatprep.subr.mxu0 0.0
      %1785 = vmatpush1.msra.mxu0 0.0
      %1786 = vmatprep.subr.mxu0 0.0
      %1787 = vmatpush1.msra.mxu0 0.0
      %1788 = vmatprep.subr.mxu0 0.0
      %1789 = vmatpush1.msra.mxu0 0.0
      %1790 = vmatprep.subr.mxu0 0.0
      %1791 = vmatpush1.msra.mxu0 0.0
      %1792 = vmatprep.subr.mxu0 0.0
      %1793 = vmatpush1.msra.mxu0 0.0
      %1794 = vmatprep.subr.mxu0 0.0
      %1795 = vmatpush1.msra.mxu0 0.0
      %1796 = vmatprep.subr.mxu0 0.0
      %1797 = vmatpush1.msra.mxu0 %v1748
      %1798 = vmatprep.subr.mxu0 0.0
      %1799 = vmatpush1.msra.mxu0 %v1747
      %1800 = vmatprep.subr.mxu0 0.0
      %1801 = vmatpush1.msra.mxu0 %v1746
      %1802 = vmatprep.subr.mxu0 0.0
      %1803 = vmatpush2.msra.mxu0 0.0
      %1804 = vmatprep.subr.mxu0 0.0
      %1805 = vmatpush2.msra.mxu0 0.0
      %1806 = vmatprep.subr.mxu0 0.0
      %1807 = vmatpush2.msra.mxu0 0.0
      %1808 = vmatprep.subr.mxu0 0.0
      %1809 = vmatpush2.msra.mxu0 0.0
      %1810 = vmatprep.subr.mxu0 0.0
      %1811 = vmatpush2.msra.mxu0 0.0
      %1812 = vmatprep.subr.mxu0 0.0
      %1813 = vmatpush2.msra.mxu0 0.0
      %1814 = vmatprep.subr.mxu0 0.0
      %1815 = vmatpush2.msra.mxu0 0.0
      %1816 = vmatprep.subr.mxu0 0.0
      %1817 = vmatpush2.msra.mxu0 0.0
      %1818 = vmatprep.subr.mxu0 0.0
      %1819 = vmatpush2.msra.mxu0 0.0
      %1820 = vmatprep.subr.mxu0 0.0
      %1821 = vmatpush2.msra.mxu0 0.0
      %1822 = vmatprep.subr.mxu0 0.0
      %1823 = vmatpush2.msra.mxu0 0.0
      %1824 = vmatprep.subr.mxu0 0.0
      %1825 = vmatpush2.msra.mxu0 0.0
      %1826 = vmatprep.subr.mxu0 0.0
      %1827 = vmatpush2.msra.mxu0 0.0
      %1828 = vmatprep.subr.mxu0 0.0
      %1829 = vmatpush2.msra.mxu0 0.0
      %1830 = vmatprep.subr.mxu0 0.0
      %1831 = vmatpush2.msra.mxu0 0.0
      %1832 = vmatprep.subr.mxu0 0.0
      %1833 = vmatpush2.msra.mxu0 0.0
      %1834 = vmatprep.mubr.f32.mxu0 0.0
      %1835 = vmatmul.mubr.f32.gmra.mxu0 %v1765
      %v1836 = vpop.f32.mrf.mxu0
      %v1837 = vadd.f32 %v1756, %v1836
      %v1838 = vpop.f32.mrf.mxu0
      %1839 = vmatprep.mubr.f32.mxu0 0.0
      %1840 = vmatmul.mubr.f32.gmra.mxu0 %v1768
      %v1841 = vpop.f32.mrf.mxu0
      %v1842 = vadd.f32 %v1761, %v1841
      %v1843 = vpop.f32.mrf.mxu0
      %1844 = vdwg.mxu0
      %v1845 = vsub.f32 0.0, %v1837
      %v1846 = vsub.f32 0.0, %v1842
      %v1847 = vmul.f32 %v1845, 1.442695
      %v1848 = vpow.pop %v1847
      %v1849 = vmul.f32 %v1846, 1.442695
      %v1850 = vpow.pop %v1849
      %v1851 = vadd.f32 %v1848, 1.0
      %v1852 = vadd.f32 %v1850, 1.0
      %v1853 = vrcp.pop %v1851
      %v1854 = vmul.f32 1.0, %v1853
      %v1855 = vrcp.pop %v1852
      %v1856 = vmul.f32 1.0, %v1855
      %1857 = vst [vmem:[%s305] sm:$0xff] %v1854
      %1858 = vst [vmem:[%s305 + $0x8] sm:$0xff] %v1856
      %p1859 = scmp.lt.s32.totalorder %s19, 1
      %s1860 = scalar_select %p1859, %s19, 1
      %s1861 = smul.addr %s1860, 2
      %s1862 = smul.addr %s1861, 8
      %s1863 = scalar_lea.vmem %s8, %s1862
      // Predicated region
      $region53: #{decoder_forward.1} parent=51 // pred_check
        %p1864 = pneg %p210
      $region54: #{decoder_forward.1} parent=51 // pred_check_branch
        %1866 = sbr.rel (%p1864) target = $region56
      $region55: #{decoder_forward.1} parent=51 // pred_region
        _
      $region56: #{decoder_forward.1} parent=51 // pred_fallthru
        _
    $region52: #{decoder_forward.1} parent=5 // pred_fallthru
      _
    %p1867 = scmp.le.s32.totalorder 2, %s14
    // Predicated region
    $region57: #{decoder_forward.1} parent=5 // pred_check
      %p1868 = pneg %p1867
    $region58: #{decoder_forward.1} parent=5 // pred_check_branch
      %1870 = sbr.rel (%p1868) target = $region60
    $region59: #{decoder_forward.1} parent=5 // pred_region
      %s1871 = ssub.s32 %s14, 2
      // Predicated region
      $region61: #{decoder_forward.1} parent=59 // pred_check
        %p1872 = pneg %p216
      $region62: #{decoder_forward.1} parent=59 // pred_check_branch
        %1874 = sbr.rel (%p1872) target = $region64
      $region63: #{decoder_forward.1} parent=59 // pred_region
        %p1875 = scmp.lt.s32.totalorder %s20, 1
        %s1876 = scalar_select %p1875, %s20, 1
        %s1877 = smul.addr %s1876, 2
        %s1878 = smul.addr %s1877, 8
        %s1879 = scalar_lea.vmem %s8, %s1878
      $region64: #{decoder_forward.1} parent=59 // pred_fallthru
        _
    $region60: #{decoder_forward.1} parent=5 // pred_fallthru
      _
  $region6: #{decoder_forward.1} parent=0 // loop_footer
    %s18 = sadd.s32 1, %s14
  $region7: #{decoder_forward.1} parent=0 // loop_footer_branch
    %13 = sbr.rel target = $region3
  $region8: #{decoder_forward.1} parent=0 // loop_exit
    _

</llo_original>
